<compile_context>
chip_gen: v5e
topology: v5e:2x2
jax: 0.10.0
libtpu: 0.0.40
codegen_flags: <defaults>
</compile_context>

<pallas_src>
import functools

import numpy as np
import jax
import jax.numpy as jnp
from jax import lax
from jax.experimental import pallas as pl
from jax.experimental.pallas import tpu as pltpu


def _round_up(x, m):
    return ((x + m - 1) // m) * m


def _up_block_kernel(x_ref, skip_ref, mask_ref, w_ref, b_ref, o_ref,
                     g_ref, s2_ref, *, W, TB, mm_dtype):
    """One grid step: TB images, fused (x+skip) -> im2col -> one MXU matmul -> bias.

    x_ref, skip_ref : (TB, CP, HW)        f32   channel-padded images, spatial on lanes
    mask_ref        : (8, TB*HW)          f32   0/1 boundary validity, one row per non-center tap
    w_ref           : (Cout, 9*CP)        bf16  im2col-packed flipped ConvTranspose2d weight
    b_ref           : (Cout, 1)           f32
    o_ref           : (TB, Cout, HW)
    g_ref           : (CP, TB*HW + 2*PAD) f32   scratch: flat channel-major residual sum
    s2_ref          : (9*CP, TB*HW)       bf16  scratch: im2col operand
    """
    CP, HW = x_ref.shape[1], x_ref.shape[2]
    LW = TB * HW
    PAD = (g_ref.shape[1] - LW) // 2   # multiple of 128 and >= W+1

    # ---- fused residual add: one lane-aligned (CP, HW) slab per image (full-tile stores).
    for b in range(TB):
        g_ref[:, PAD + b * HW:PAD + (b + 1) * HW] = x_ref[b] + skip_ref[b]

    # ---- im2col: 9 lane-shifted taps of the flat buffer.  Image seams / top / bottom /
    # left / right boundaries are handled by the precomputed 0/1 masks (select, not
    # multiply, so uninitialized halo lanes can never leak).  Each tap store covers a
    # full CP-row (sublane-aligned) block of the bf16 scratch -> unmasked vst.
    mrow = 0
    for dy in range(3):
        for dx in range(3):
            off = (dy - 1) * W + (dx - 1)
            tap = g_ref[:, PAD + off:PAD + off + LW]           # (CP, LW) f32
            if (dy, dx) != (1, 1):
                valid = mask_ref[mrow:mrow + 1, :] > 0.0        # (1, LW) bool
                tap = jnp.where(valid, tap, 0.0)
                mrow += 1
            t = dy * 3 + dx
            s2_ref[t * CP:(t + 1) * CP, :] = tap.astype(mm_dtype)

    # ---- single MXU matmul over the whole TB*HW lane axis, f32 accumulation.
    acc = jnp.dot(w_ref[...], s2_ref[...],
                  preferred_element_type=jnp.float32)           # (Cout, TB*HW)
    bias = b_ref[...]                                           # (Cout, 1)
    for b in range(TB):
        o_ref[b] = (acc[:, b * HW:(b + 1) * HW] + bias).astype(o_ref.dtype)


def res_ed_up_block_upconv(x_nchw, skip_nchw, wt, bias, *,
                           images_per_step=None, use_bf16=True,
                           vmem_budget_bytes=24 << 20):
    """ResED_UpBlock('upconv', padding=1): ConvTranspose2d(k=3, s=1, p=1)(x + skip).

    x, skip: (N, Cin, H, W);  wt: (Cin, Cout, 3, 3) [PyTorch ConvTranspose2d];  bias: (Cout,).
    Returns (N, Cout, H, W).
    """
    N, Cin, H, W = x_nchw.shape
    Cout = wt.shape[1]
    HW = H * W
    assert HW % 128 == 0, "H*W must be a multiple of 128 for lane-dense stores"

    mm_dtype = jnp.bfloat16 if use_bf16 else jnp.float32   # precision switch (bit-parity: f32)
    sub = 16 if mm_dtype == jnp.bfloat16 else 8            # sublane tile of the im2col scratch
    CP = _round_up(Cin, sub)                               # per-tap channel block (full tiles)
    Kp = 9 * CP
    PAD = _round_up(W + 1, 128)                            # flat halo: every tap read in-bounds

    # images per grid step: fold the batch into the matmul lane axis, but keep >=2 steps
    # (both v7x TensorCores get work) and cap the per-step working set for v7x's 64 MiB VMEM.
    if images_per_step is None:
        bytes_per_img = (Kp * HW * jnp.dtype(mm_dtype).itemsize   # s2 scratch
                         + CP * HW * 4                            # g interior
                         + 2 * 2 * CP * HW * 4                    # x/skip blocks (double-buffered)
                         + 2 * Cout * HW * 4)                     # out block
        cap = max(1, int(vmem_budget_bytes // bytes_per_img))
        images_per_step = max(1, min(cap, (N + 1) // 2)) if N >= 2 else 1
    TB = int(images_per_step)
    steps = -(-N // TB)
    Npad = steps * TB
    LW = TB * HW

    # ---- one-time host/wrapper packing (nothing below is recomputed per grid step) ----
    # Inputs: NCHW -> (N, C, H*W) is a free reshape; pad batch to a TB multiple and channels
    # to CP (zero channels meet zero weight columns; a no-op for real model widths >= 16).
    x2 = jnp.pad(x_nchw.reshape(N, Cin, HW), ((0, Npad - N), (0, CP - Cin), (0, 0)))
    s2 = jnp.pad(skip_nchw.reshape(N, Cin, HW), ((0, Npad - N), (0, CP - Cin), (0, 0)))

    # stride-1 ConvTranspose2d == "same" correlation with flipped kernel + swapped channels.
    # Pack once as (Cout, 9*CP): tap (dy,dx) outer, channel inner, zero-padded channels.
    w_flip = wt[:, :, ::-1, ::-1]                                   # [ci, co, dy, dx]
    w9 = jnp.transpose(w_flip, (1, 2, 3, 0))                        # [co, dy, dx, ci]
    w9 = jnp.pad(w9, ((0, 0), (0, 0), (0, 0), (0, CP - Cin)))
    w_mm = w9.reshape(Cout, Kp).astype(mm_dtype)
    b2 = bias.reshape(Cout, 1).astype(jnp.float32)

    # Boundary-validity masks (top/bottom rows across image seams, left/right columns):
    # one 0/1 row per non-center tap, lane order = b*HW + h*W + w.  Built on the host.
    lane = np.arange(LW)
    p = lane % HW
    c = p % W
    top, bot = p >= W, p < HW - W
    left, right = c >= 1, c <= W - 2
    rows = []
    for dy in range(3):
        for dx in range(3):
            if (dy, dx) == (1, 1):
                continue
            m = np.ones(LW, dtype=bool)
            if dy == 0:
                m &= top
            if dy == 2:
                m &= bot
            if dx == 0:
                m &= left
            if dx == 2:
                m &= right
            rows.append(m)
    masks = jnp.asarray(np.stack(rows).astype(np.float32))          # (8, TB*HW)

    kernel = functools.partial(_up_block_kernel, W=W, TB=TB, mm_dtype=mm_dtype)
    out = pl.pallas_call(
        kernel,
        out_shape=jax.ShapeDtypeStruct((Npad, Cout, HW), x_nchw.dtype),
        grid_spec=pltpu.PrefetchScalarGridSpec(
            num_scalar_prefetch=0,
            grid=(steps,),  # TB images per step; >=2 steps so both v7x TCs get work
            in_specs=[
                pl.BlockSpec((TB, CP, HW), lambda n: (n, 0, 0)),
                pl.BlockSpec((TB, CP, HW), lambda n: (n, 0, 0)),
                pl.BlockSpec((8, LW), lambda n: (0, 0)),
                pl.BlockSpec((Cout, Kp), lambda n: (0, 0)),
                pl.BlockSpec((Cout, 1), lambda n: (0, 0)),
            ],
            out_specs=pl.BlockSpec((TB, Cout, HW), lambda n: (n, 0, 0)),
            scratch_shapes=[
                pltpu.VMEM((CP, LW + 2 * PAD), jnp.float32),  # flat residual sum (+halo)
                pltpu.VMEM((Kp, LW), mm_dtype),               # bf16 im2col operand
            ],
        ),
        compiler_params=pltpu.CompilerParams(
            dimension_semantics=("parallel",),
            vmem_limit_bytes=32 * 1024 * 1024,
        ),
    )(x2, s2, masks, w_mm, b2)

    return out[:N].reshape(N, Cout, H, W)


if __name__ == "__main__":
    # small shapes consistent with the module's forward; N=4 exercises the batched
    # lane-axis path (TB=2 images per grid step, 2 grid steps).
    N, Cin, Cout, H, W = 4, 4, 8, 16, 16

    key = jax.random.PRNGKey(0)
    kx, ks, kw, kb = jax.random.split(key, 4)
    x = jax.random.normal(kx, (N, Cin, H, W), jnp.float32)
    skip = jax.random.normal(ks, (N, Cin, H, W), jnp.float32)
    # PyTorch ConvTranspose2d weight layout is (Cin, Cout, 3, 3)
    wt = jax.random.normal(kw, (Cin, Cout, 3, 3), jnp.float32) * 0.1
    bias = jax.random.normal(kb, (Cout,), jnp.float32) * 0.1

    out = jax.block_until_ready(res_ed_up_block_upconv(x, skip, wt, bias))

    # pure-JAX f32 reference: add + "same" correlation with flipped/transposed kernel
    s_nhwc = jnp.transpose(x + skip, (0, 2, 3, 1))
    w_eff = jnp.transpose(wt[:, :, ::-1, ::-1], (2, 3, 0, 1))
    ref = lax.conv_general_dilated(
        s_nhwc, w_eff, window_strides=(1, 1), padding=((1, 1), (1, 1)),
        dimension_numbers=("NHWC", "HWIO", "NHWC")) + bias[None, None, None, :]
    ref = jnp.transpose(ref, (0, 3, 1, 2))

    assert out.shape == (N, Cout, H, W)
    # bf16 MXU operands with f32 accumulation -> ~1e-2 relative error budget vs f32 reference
    err = float(jnp.max(jnp.abs(out - ref)))
    assert jnp.allclose(out, ref, atol=5e-2, rtol=5e-2), err
    print("KERNEL_OK")
</pallas_src>

<mosaic_0001>
module attributes {stable_mosaic.version = 11 : i64} {
  func.func @_up_block_kernel(%arg0: i32, %arg1: memref<2x16x256xf32, #tpu.memory_space<vmem>>, %arg2: memref<2x16x256xf32, #tpu.memory_space<vmem>>, %arg3: memref<8x512xf32, #tpu.memory_space<vmem>>, %arg4: memref<8x144xbf16, #tpu.memory_space<vmem>>, %arg5: memref<8x1xf32, #tpu.memory_space<vmem>>, %arg6: memref<2x8x256xf32, #tpu.memory_space<vmem>>, %arg7: memref<16x768xf32, #tpu.memory_space<vmem>>, %arg8: memref<144x512xbf16, #tpu.memory_space<vmem>>) attributes {dimension_semantics = [#tpu.dimension_semantics<parallel>], iteration_bounds = array<i64: 2>, scalar_prefetch = 0 : i64, scratch_operands = 2 : i64, tpu.core_type = #tpu.core_type<tc>, window_params = [{transform_indices = @transform_0, window_bounds = array<i64: 2, 16, 256>}, {transform_indices = @transform_1, window_bounds = array<i64: 2, 16, 256>}, {pipeline_mode = #tpu.pipeline_mode<synchronous>, transform_indices = @transform_2, window_bounds = array<i64: 8, 512>}, {pipeline_mode = #tpu.pipeline_mode<synchronous>, transform_indices = @transform_3, window_bounds = array<i64: 8, 144>}, {pipeline_mode = #tpu.pipeline_mode<synchronous>, transform_indices = @transform_4, window_bounds = array<i64: 8, 1>}, {transform_indices = @transform_5, window_bounds = array<i64: 2, 8, 256>}]} {
    %c0 = arith.constant 0 : index
    %c0_0 = arith.constant 0 : index
    %c0_1 = arith.constant 0 : index
    %0 = vector.load %arg1[%c0, %c0_0, %c0_1] : memref<2x16x256xf32, #tpu.memory_space<vmem>>, vector<1x16x256xf32>
    %1 = vector.shape_cast %0 : vector<1x16x256xf32> to vector<16x256xf32>
    %c0_2 = arith.constant 0 : index
    %c0_3 = arith.constant 0 : index
    %c0_4 = arith.constant 0 : index
    %2 = vector.load %arg2[%c0_2, %c0_3, %c0_4] : memref<2x16x256xf32, #tpu.memory_space<vmem>>, vector<1x16x256xf32>
    %3 = vector.shape_cast %2 : vector<1x16x256xf32> to vector<16x256xf32>
    %4 = arith.addf %1, %3 : vector<16x256xf32>
    %c0_5 = arith.constant 0 : index
    %c128 = arith.constant 128 : index
    %5 = vector.load %arg7[%c0_5, %c128] : memref<16x768xf32, #tpu.memory_space<vmem>>, vector<16x256xf32>
    tpu.vector_store %arg7[%c0_5, %c128], %4 {strides = array<i32>} : memref<16x768xf32, #tpu.memory_space<vmem>>, vector<16x256xf32>,
    %c1 = arith.constant 1 : index
    %c0_6 = arith.constant 0 : index
    %c0_7 = arith.constant 0 : index
    %6 = vector.load %arg1[%c1, %c0_6, %c0_7] : memref<2x16x256xf32, #tpu.memory_space<vmem>>, vector<1x16x256xf32>
    %7 = vector.shape_cast %6 : vector<1x16x256xf32> to vector<16x256xf32>
    %c1_8 = arith.constant 1 : index
    %c0_9 = arith.constant 0 : index
    %c0_10 = arith.constant 0 : index
    %8 = vector.load %arg2[%c1_8, %c0_9, %c0_10] : memref<2x16x256xf32, #tpu.memory_space<vmem>>, vector<1x16x256xf32>
    %9 = vector.shape_cast %8 : vector<1x16x256xf32> to vector<16x256xf32>
    %10 = arith.addf %7, %9 : vector<16x256xf32>
    %c0_11 = arith.constant 0 : index
    %c384 = arith.constant 384 : index
    %11 = vector.load %arg7[%c0_11, %c384] : memref<16x768xf32, #tpu.memory_space<vmem>>, vector<16x256xf32>
    tpu.vector_store %arg7[%c0_11, %c384], %10 {strides = array<i32>} : memref<16x768xf32, #tpu.memory_space<vmem>>, vector<16x256xf32>,
    %c0_12 = arith.constant 0 : index
    %c111 = arith.constant 111 : index
    %12 = vector.load %arg7[%c0_12, %c111] : memref<16x768xf32, #tpu.memory_space<vmem>>, vector<16x512xf32>
    %c0_13 = arith.constant 0 : index
    %c0_14 = arith.constant 0 : index
    %13 = vector.load %arg3[%c0_13, %c0_14] : memref<8x512xf32, #tpu.memory_space<vmem>>, vector<1x512xf32>
    %cst = arith.constant 0.000000e+00 : f32
    %14 = vector.broadcast %cst : f32 to vector<1x512xf32>
    %15 = arith.cmpf ogt, %13, %14 : vector<1x512xf32>
    %cst_15 = arith.constant 0.000000e+00 : f32
    %16 = vector.shape_cast %15 : vector<1x512xi1> to vector<1x512xi1>
    %17 = vector.broadcast %16 : vector<1x512xi1> to vector<16x512xi1>
    %18 = vector.broadcast %cst_15 : f32 to vector<16x512xf32>
    %19 = arith.select %17, %12, %18 : vector<16x512xi1>, vector<16x512xf32>
    %20 = arith.truncf %19 : vector<16x512xf32> to vector<16x512xbf16>
    %c0_16 = arith.constant 0 : index
    %c0_17 = arith.constant 0 : index
    %21 = vector.load %arg8[%c0_16, %c0_17] : memref<144x512xbf16, #tpu.memory_space<vmem>>, vector<16x512xbf16>
    tpu.vector_store %arg8[%c0_16, %c0_17], %20 {strides = array<i32>} : memref<144x512xbf16, #tpu.memory_space<vmem>>, vector<16x512xbf16>,
    %c0_18 = arith.constant 0 : index
    %c112 = arith.constant 112 : index
    %22 = vector.load %arg7[%c0_18, %c112] : memref<16x768xf32, #tpu.memory_space<vmem>>, vector<16x512xf32>
    %c1_19 = arith.constant 1 : index
    %c0_20 = arith.constant 0 : index
    %23 = vector.load %arg3[%c1_19, %c0_20] : memref<8x512xf32, #tpu.memory_space<vmem>>, vector<1x512xf32>
    %cst_21 = arith.constant 0.000000e+00 : f32
    %24 = vector.broadcast %cst_21 : f32 to vector<1x512xf32>
    %25 = arith.cmpf ogt, %23, %24 : vector<1x512xf32>
    %cst_22 = arith.constant 0.000000e+00 : f32
    %26 = vector.shape_cast %25 : vector<1x512xi1> to vector<1x512xi1>
    %27 = vector.broadcast %26 : vector<1x512xi1> to vector<16x512xi1>
    %28 = vector.broadcast %cst_22 : f32 to vector<16x512xf32>
    %29 = arith.select %27, %22, %28 : vector<16x512xi1>, vector<16x512xf32>
    %30 = arith.truncf %29 : vector<16x512xf32> to vector<16x512xbf16>
    %c16 = arith.constant 16 : index
    %c0_23 = arith.constant 0 : index
    %31 = vector.load %arg8[%c16, %c0_23] : memref<144x512xbf16, #tpu.memory_space<vmem>>, vector<16x512xbf16>
    tpu.vector_store %arg8[%c16, %c0_23], %30 {strides = array<i32>} : memref<144x512xbf16, #tpu.memory_space<vmem>>, vector<16x512xbf16>,
    %c0_24 = arith.constant 0 : index
    %c113 = arith.constant 113 : index
    %32 = vector.load %arg7[%c0_24, %c113] : memref<16x768xf32, #tpu.memory_space<vmem>>, vector<16x512xf32>
    %c2 = arith.constant 2 : index
    %c0_25 = arith.constant 0 : index
    %33 = vector.load %arg3[%c2, %c0_25] : memref<8x512xf32, #tpu.memory_space<vmem>>, vector<1x512xf32>
    %cst_26 = arith.constant 0.000000e+00 : f32
    %34 = vector.broadcast %cst_26 : f32 to vector<1x512xf32>
    %35 = arith.cmpf ogt, %33, %34 : vector<1x512xf32>
    %cst_27 = arith.constant 0.000000e+00 : f32
    %36 = vector.shape_cast %35 : vector<1x512xi1> to vector<1x512xi1>
    %37 = vector.broadcast %36 : vector<1x512xi1> to vector<16x512xi1>
    %38 = vector.broadcast %cst_27 : f32 to vector<16x512xf32>
    %39 = arith.select %37, %32, %38 : vector<16x512xi1>, vector<16x512xf32>
    %40 = arith.truncf %39 : vector<16x512xf32> to vector<16x512xbf16>
    %c32 = arith.constant 32 : index
    %c0_28 = arith.constant 0 : index
    %41 = vector.load %arg8[%c32, %c0_28] : memref<144x512xbf16, #tpu.memory_space<vmem>>, vector<16x512xbf16>
    tpu.vector_store %arg8[%c32, %c0_28], %40 {strides = array<i32>} : memref<144x512xbf16, #tpu.memory_space<vmem>>, vector<16x512xbf16>,
    %c0_29 = arith.constant 0 : index
    %c127 = arith.constant 127 : index
    %42 = vector.load %arg7[%c0_29, %c127] : memref<16x768xf32, #tpu.memory_space<vmem>>, vector<16x512xf32>
    %c3 = arith.constant 3 : index
    %c0_30 = arith.constant 0 : index
    %43 = vector.load %arg3[%c3, %c0_30] : memref<8x512xf32, #tpu.memory_space<vmem>>, vector<1x512xf32>
    %cst_31 = arith.constant 0.000000e+00 : f32
    %44 = vector.broadcast %cst_31 : f32 to vector<1x512xf32>
    %45 = arith.cmpf ogt, %43, %44 : vector<1x512xf32>
    %cst_32 = arith.constant 0.000000e+00 : f32
    %46 = vector.shape_cast %45 : vector<1x512xi1> to vector<1x512xi1>
    %47 = vector.broadcast %46 : vector<1x512xi1> to vector<16x512xi1>
    %48 = vector.broadcast %cst_32 : f32 to vector<16x512xf32>
    %49 = arith.select %47, %42, %48 : vector<16x512xi1>, vector<16x512xf32>
    %50 = arith.truncf %49 : vector<16x512xf32> to vector<16x512xbf16>
    %c48 = arith.constant 48 : index
    %c0_33 = arith.constant 0 : index
    %51 = vector.load %arg8[%c48, %c0_33] : memref<144x512xbf16, #tpu.memory_space<vmem>>, vector<16x512xbf16>
    tpu.vector_store %arg8[%c48, %c0_33], %50 {strides = array<i32>} : memref<144x512xbf16, #tpu.memory_space<vmem>>, vector<16x512xbf16>,
    %c0_34 = arith.constant 0 : index
    %c128_35 = arith.constant 128 : index
    %52 = vector.load %arg7[%c0_34, %c128_35] : memref<16x768xf32, #tpu.memory_space<vmem>>, vector<16x512xf32>
    %53 = arith.truncf %52 : vector<16x512xf32> to vector<16x512xbf16>
    %c64 = arith.constant 64 : index
    %c0_36 = arith.constant 0 : index
    %54 = vector.load %arg8[%c64, %c0_36] : memref<144x512xbf16, #tpu.memory_space<vmem>>, vector<16x512xbf16>
    tpu.vector_store %arg8[%c64, %c0_36], %53 {strides = array<i32>} : memref<144x512xbf16, #tpu.memory_space<vmem>>, vector<16x512xbf16>,
    %c0_37 = arith.constant 0 : index
    %c129 = arith.constant 129 : index
    %55 = vector.load %arg7[%c0_37, %c129] : memref<16x768xf32, #tpu.memory_space<vmem>>, vector<16x512xf32>
    %c4 = arith.constant 4 : index
    %c0_38 = arith.constant 0 : index
    %56 = vector.load %arg3[%c4, %c0_38] : memref<8x512xf32, #tpu.memory_space<vmem>>, vector<1x512xf32>
    %cst_39 = arith.constant 0.000000e+00 : f32
    %57 = vector.broadcast %cst_39 : f32 to vector<1x512xf32>
    %58 = arith.cmpf ogt, %56, %57 : vector<1x512xf32>
    %cst_40 = arith.constant 0.000000e+00 : f32
    %59 = vector.shape_cast %58 : vector<1x512xi1> to vector<1x512xi1>
    %60 = vector.broadcast %59 : vector<1x512xi1> to vector<16x512xi1>
    %61 = vector.broadcast %cst_40 : f32 to vector<16x512xf32>
    %62 = arith.select %60, %55, %61 : vector<16x512xi1>, vector<16x512xf32>
    %63 = arith.truncf %62 : vector<16x512xf32> to vector<16x512xbf16>
    %c80 = arith.constant 80 : index
    %c0_41 = arith.constant 0 : index
    %64 = vector.load %arg8[%c80, %c0_41] : memref<144x512xbf16, #tpu.memory_space<vmem>>, vector<16x512xbf16>
    tpu.vector_store %arg8[%c80, %c0_41], %63 {strides = array<i32>} : memref<144x512xbf16, #tpu.memory_space<vmem>>, vector<16x512xbf16>,
    %c0_42 = arith.constant 0 : index
    %c143 = arith.constant 143 : index
    %65 = vector.load %arg7[%c0_42, %c143] : memref<16x768xf32, #tpu.memory_space<vmem>>, vector<16x512xf32>
    %c5 = arith.constant 5 : index
    %c0_43 = arith.constant 0 : index
    %66 = vector.load %arg3[%c5, %c0_43] : memref<8x512xf32, #tpu.memory_space<vmem>>, vector<1x512xf32>
    %cst_44 = arith.constant 0.000000e+00 : f32
    %67 = vector.broadcast %cst_44 : f32 to vector<1x512xf32>
    %68 = arith.cmpf ogt, %66, %67 : vector<1x512xf32>
    %cst_45 = arith.constant 0.000000e+00 : f32
    %69 = vector.shape_cast %68 : vector<1x512xi1> to vector<1x512xi1>
    %70 = vector.broadcast %69 : vector<1x512xi1> to vector<16x512xi1>
    %71 = vector.broadcast %cst_45 : f32 to vector<16x512xf32>
    %72 = arith.select %70, %65, %71 : vector<16x512xi1>, vector<16x512xf32>
    %73 = arith.truncf %72 : vector<16x512xf32> to vector<16x512xbf16>
    %c96 = arith.constant 96 : index
    %c0_46 = arith.constant 0 : index
    %74 = vector.load %arg8[%c96, %c0_46] : memref<144x512xbf16, #tpu.memory_space<vmem>>, vector<16x512xbf16>
    tpu.vector_store %arg8[%c96, %c0_46], %73 {strides = array<i32>} : memref<144x512xbf16, #tpu.memory_space<vmem>>, vector<16x512xbf16>,
    %c0_47 = arith.constant 0 : index
    %c144 = arith.constant 144 : index
    %75 = vector.load %arg7[%c0_47, %c144] : memref<16x768xf32, #tpu.memory_space<vmem>>, vector<16x512xf32>
    %c6 = arith.constant 6 : index
    %c0_48 = arith.constant 0 : index
    %76 = vector.load %arg3[%c6, %c0_48] : memref<8x512xf32, #tpu.memory_space<vmem>>, vector<1x512xf32>
    %cst_49 = arith.constant 0.000000e+00 : f32
    %77 = vector.broadcast %cst_49 : f32 to vector<1x512xf32>
    %78 = arith.cmpf ogt, %76, %77 : vector<1x512xf32>
    %cst_50 = arith.constant 0.000000e+00 : f32
    %79 = vector.shape_cast %78 : vector<1x512xi1> to vector<1x512xi1>
    %80 = vector.broadcast %79 : vector<1x512xi1> to vector<16x512xi1>
    %81 = vector.broadcast %cst_50 : f32 to vector<16x512xf32>
    %82 = arith.select %80, %75, %81 : vector<16x512xi1>, vector<16x512xf32>
    %83 = arith.truncf %82 : vector<16x512xf32> to vector<16x512xbf16>
    %c112_51 = arith.constant 112 : index
    %c0_52 = arith.constant 0 : index
    %84 = vector.load %arg8[%c112_51, %c0_52] : memref<144x512xbf16, #tpu.memory_space<vmem>>, vector<16x512xbf16>
    tpu.vector_store %arg8[%c112_51, %c0_52], %83 {strides = array<i32>} : memref<144x512xbf16, #tpu.memory_space<vmem>>, vector<16x512xbf16>,
    %c0_53 = arith.constant 0 : index
    %c145 = arith.constant 145 : index
    %85 = vector.load %arg7[%c0_53, %c145] : memref<16x768xf32, #tpu.memory_space<vmem>>, vector<16x512xf32>
    %c7 = arith.constant 7 : index
    %c0_54 = arith.constant 0 : index
    %86 = vector.load %arg3[%c7, %c0_54] : memref<8x512xf32, #tpu.memory_space<vmem>>, vector<1x512xf32>
    %cst_55 = arith.constant 0.000000e+00 : f32
    %87 = vector.broadcast %cst_55 : f32 to vector<1x512xf32>
    %88 = arith.cmpf ogt, %86, %87 : vector<1x512xf32>
    %cst_56 = arith.constant 0.000000e+00 : f32
    %89 = vector.shape_cast %88 : vector<1x512xi1> to vector<1x512xi1>
    %90 = vector.broadcast %89 : vector<1x512xi1> to vector<16x512xi1>
    %91 = vector.broadcast %cst_56 : f32 to vector<16x512xf32>
    %92 = arith.select %90, %85, %91 : vector<16x512xi1>, vector<16x512xf32>
    %93 = arith.truncf %92 : vector<16x512xf32> to vector<16x512xbf16>
    %c128_57 = arith.constant 128 : index
    %c0_58 = arith.constant 0 : index
    %94 = vector.load %arg8[%c128_57, %c0_58] : memref<144x512xbf16, #tpu.memory_space<vmem>>, vector<16x512xbf16>
    tpu.vector_store %arg8[%c128_57, %c0_58], %93 {strides = array<i32>} : memref<144x512xbf16, #tpu.memory_space<vmem>>, vector<16x512xbf16>,
    %c0_59 = arith.constant 0 : index
    %c0_60 = arith.constant 0 : index
    %95 = vector.load %arg4[%c0_59, %c0_60] : memref<8x144xbf16, #tpu.memory_space<vmem>>, vector<8x144xbf16>
    %c0_61 = arith.constant 0 : index
    %c0_62 = arith.constant 0 : index
    %96 = vector.load %arg8[%c0_61, %c0_62] : memref<144x512xbf16, #tpu.memory_space<vmem>>, vector<144x512xbf16>
    %cst_63 = arith.constant dense<0.000000e+00> : vector<8x512xf32>
    %97 = tpu.matmul %95, %96, %cst_63 {dimension_numbers = #tpu.dot_dimension_numbers<[1], [0], [0], [1], [0, 0, 1, 1], [], []>} : vector<8x144xbf16>, vector<144x512xbf16>, vector<8x512xf32> -> vector<8x512xf32>
    %c0_64 = arith.constant 0 : index
    %c0_65 = arith.constant 0 : index
    %98 = vector.load %arg5[%c0_64, %c0_65] : memref<8x1xf32, #tpu.memory_space<vmem>>, vector<8x1xf32>
    %99 = vector.extract_strided_slice %97 {offsets = [0, 0], sizes = [8, 256], strides = [1, 1]} : vector<8x512xf32> to vector<8x256xf32>
    %100 = vector.broadcast %98 : vector<8x1xf32> to vector<8x256xf32>
    %101 = arith.addf %99, %100 : vector<8x256xf32>
    %c0_66 = arith.constant 0 : index
    %c0_67 = arith.constant 0 : index
    %c0_68 = arith.constant 0 : index
    %102 = vector.load %arg6[%c0_66, %c0_67, %c0_68] : memref<2x8x256xf32, #tpu.memory_space<vmem>>, vector<1x8x256xf32>
    %103 = vector.shape_cast %102 : vector<1x8x256xf32> to vector<8x256xf32>
    %104 = vector.shape_cast %101 : vector<8x256xf32> to vector<1x8x256xf32>
    tpu.vector_store %arg6[%c0_66, %c0_67, %c0_68], %104 {strides = array<i32>} : memref<2x8x256xf32, #tpu.memory_space<vmem>>, vector<1x8x256xf32>,
    %105 = vector.extract_strided_slice %97 {offsets = [0, 256], sizes = [8, 256], strides = [1, 1]} : vector<8x512xf32> to vector<8x256xf32>
    %106 = vector.broadcast %98 : vector<8x1xf32> to vector<8x256xf32>
    %107 = arith.addf %105, %106 : vector<8x256xf32>
    %c1_69 = arith.constant 1 : index
    %c0_70 = arith.constant 0 : index
    %c0_71 = arith.constant 0 : index
    %108 = vector.load %arg6[%c1_69, %c0_70, %c0_71] : memref<2x8x256xf32, #tpu.memory_space<vmem>>, vector<1x8x256xf32>
    %109 = vector.shape_cast %108 : vector<1x8x256xf32> to vector<8x256xf32>
    %110 = vector.shape_cast %107 : vector<8x256xf32> to vector<1x8x256xf32>
    tpu.vector_store %arg6[%c1_69, %c0_70, %c0_71], %110 {strides = array<i32>} : memref<2x8x256xf32, #tpu.memory_space<vmem>>, vector<1x8x256xf32>,
    return
  }
  func.func @transform_0(%arg0: i32) -> (i32, i32, i32) {
    %c0_i32 = arith.constant 0 : i32
    %c0_i32_0 = arith.constant 0 : i32
    %c0_i32_1 = arith.constant 0 : i32
    return %arg0, %c0_i32, %c0_i32_0 : i32, i32, i32
  }
  func.func @transform_1(%arg0: i32) -> (i32, i32, i32) {
    %c0_i32 = arith.constant 0 : i32
    %c0_i32_0 = arith.constant 0 : i32
    %c0_i32_1 = arith.constant 0 : i32
    return %arg0, %c0_i32, %c0_i32_0 : i32, i32, i32
  }
  func.func @transform_2(%arg0: i32) -> (i32, i32) {
    %c0_i32 = arith.constant 0 : i32
    %c0_i32_0 = arith.constant 0 : i32
    %c0_i32_1 = arith.constant 0 : i32
    return %c0_i32, %c0_i32_0 : i32, i32
  }
  func.func @transform_3(%arg0: i32) -> (i32, i32) {
    %c0_i32 = arith.constant 0 : i32
    %c0_i32_0 = arith.constant 0 : i32
    %c0_i32_1 = arith.constant 0 : i32
    return %c0_i32, %c0_i32_0 : i32, i32
  }
  func.func @transform_4(%arg0: i32) -> (i32, i32) {
    %c0_i32 = arith.constant 0 : i32
    %c0_i32_0 = arith.constant 0 : i32
    %c0_i32_1 = arith.constant 0 : i32
    return %c0_i32, %c0_i32_0 : i32, i32
  }
  func.func @transform_5(%arg0: i32) -> (i32, i32, i32) {
    %c0_i32 = arith.constant 0 : i32
    %c0_i32_0 = arith.constant 0 : i32
    %c0_i32_1 = arith.constant 0 : i32
    return %arg0, %c0_i32, %c0_i32_0 : i32, i32, i32
  }
}

</mosaic_0001>

<llo_original>
// kernel: tpu_custom_call.1
$region0: #{tpu_custom_call.1}
  #allocation0 [shape = 'u32[]', space=smem, size = 0x4, offset = 0x4, fixed_abs, tag = 'smem constant byte address 0x4 - core index']
  #allocation1 [shape = 'u32[72,128]{1,0:T(1,128)}', space=vmem, size = 0x9000, scoped, tag = 'internal scratch']
  #allocation2 [shape = 'f32[16,768]{1,0:T(8,128)}', space=vmem, size = 0xc000, scoped, tag = 'scratch operand']
  #allocation3 [shape = 'bf16[144,512]{1,0:T(8,128)(2,1)}', space=vmem, size = 0x24000, scoped, tag = 'scratch operand']
  %s0 = inlined_call_operand.hbm [shape: f32[4,16,256], index: 0, kind: input, shape index: {}]
  %s1 = inlined_call_operand.hbm [shape: f32[4,16,256], index: 1, kind: input, shape index: {}]
  %s2 = inlined_call_operand.hbm [shape: f32[8,512], index: 2, kind: input, shape index: {}]
  %s3 = inlined_call_operand.vmem [shape: bf16[8,144], index: 3, kind: input, shape index: {}]
  %s4 = inlined_call_operand.vmem [shape: f32[8,1], index: 4, kind: input, shape index: {}]
  %s5 = inlined_call_operand.hbm [shape: f32[4,8,256], index: 5, kind: output, shape index: {}]
  %s6 = sld [smem:[#allocation0]]
  $region65: #{tpu_custom_call.1} parent=0
    _
  %s8 = ssub.s32 1, %s6
  %s9 = scalar_select 0, %s8, %s6
  $region1: #{tpu_custom_call.1} parent=0
    #allocation4 [shape = 'u8[65536]{0}', space=vmem, size = 0x10000, scoped, tag = 'input window, operand 0']
    #allocation5 [shape = 's32[2]{0}', space=sflag, size = 0x8, scoped, tag = 'scoped memory for tpu_custom_call.1']
    #allocation6 [shape = 's32[2]{0}', space=sflag, size = 0x8, scoped, tag = 'scoped memory for tpu_custom_call.1']
    #allocation7 [shape = 'u8[65536]{0}', space=vmem, size = 0x10000, scoped, tag = 'input window, operand 1']
    #allocation8 [shape = 's32[2]{0}', space=sflag, size = 0x8, scoped, tag = 'scoped memory for tpu_custom_call.1']
    #allocation9 [shape = 'u8[16384]{0}', space=vmem, size = 0x4000, scoped, tag = 'input window, operand 2, single buffered']
    #allocation10 [shape = 'u8[32768]{0}', space=vmem, size = 0x8000, scoped, tag = 'output window, operand 0']
    %10 = vsyncpa [#allocation5], 0
    %s11 = scalar_lea.sflag [#allocation5], 1
    %12 = vsyncpa %s11, 0
    %13 = vsyncpa [#allocation8], 0
    %s14 = scalar_lea.sflag [#allocation8], 1
    %15 = vsyncpa %s14, 0
    %16 = vsyncpa [#allocation6], 0
    %s17 = scalar_lea.sflag [#allocation6], 1
    %18 = vsyncpa %s17, 0
    loop: start=0, step=1, limit=4
    $region2: #{tpu_custom_call.1} parent=1 // loop_pre_header
      _
    $region3: #{tpu_custom_call.1} parent=1 // loop_header
      %s20 = sphi 0, %s24
      %p21 = scmp.ge.s32.totalorder %s20, 4
      %s30 = sphi 0, %s32
      %s33 = sphi 0, %s30
      %s34 = sphi 0, %s33
      %s50 = sphi 0, %s34
      %s56 = sphi 0, %s58
      %s59 = sphi 0, %s56
      %s60 = sphi 0, %s59
      %s76 = sphi 0, %s60
      %s80 = sphi 0, %s80
      %s82 = sphi 0, %s80
      %s83 = sphi 0, %s82
      %s97 = sphi 0, %s83
      %s101 = sphi 0, %s101
      %s103 = sphi 0, %s101
      %s104 = sphi 0, %s103
      %s118 = sphi 0, %s104
      %s122 = sphi 0, %s122
      %s124 = sphi 0, %s122
      %s125 = sphi 0, %s124
      %s139 = sphi 0, %s125
      %s145 = sphi 0, %s147
      %s148 = sphi 0, %s145
      %s149 = sphi 0, %s148
      %s165 = sphi 0, %s149
    $region4: #{tpu_custom_call.1} parent=1 // loop_header_branch
      %23 = sbr.rel (%p21) target = $region8
    $region5: #{tpu_custom_call.1} parent=1 // loop_body
      %s25 = ssub.s32 %s20, 1
      %s26 = ssub.s32 %s20, 2
      %s27 = sadd.s32 %s20, 1
      %s28 = ssub.s32 %s20, %s27
      %p29 = scmp.eq.s32.totalorder %s28, 0
      %s31 = sadd.s32 %s30, 1
      %s32 = scalar_select %p29, %s30, %s31
      %p35 = pneg %p29
      %p36 = scmp.eq.s32.totalorder %s20, 1
      %p37 = por %p35, %p36
      %p38 = scmp.ne.s32.totalorder %s30, %s33
      %p39 = scmp.eq.s32.totalorder %s20, 0
      %p40 = por %p38, %p39
      %p41 = scmp.ne.s32.totalorder %s30, %s33
      %p42 = scmp.eq.s32.totalorder %s25, 1
      %p43 = por %p41, %p42
      %p44 = scmp.ne.s32.totalorder %s33, %s34
      %p45 = scmp.eq.s32.totalorder %s25, 0
      %p46 = por %p44, %p45
      %p47 = scmp.ne.s32.totalorder %s33, %s34
      %p48 = scmp.eq.s32.totalorder %s26, 1
      %p49 = por %p47, %p48
      %p51 = scmp.ne.s32.totalorder %s34, %s50
      %p52 = scmp.eq.s32.totalorder %s26, 0
      %p53 = por %p51, %p52
      %s54 = ssub.s32 %s20, %s27
      %p55 = scmp.eq.s32.totalorder %s54, 0
      %s57 = sadd.s32 %s56, 1
      %s58 = scalar_select %p55, %s56, %s57
      %p61 = pneg %p55
      %p62 = scmp.eq.s32.totalorder %s20, 1
      %p63 = por %p61, %p62
      %p64 = scmp.ne.s32.totalorder %s56, %s59
      %p65 = scmp.eq.s32.totalorder %s20, 0
      %p66 = por %p64, %p65
      %p67 = scmp.ne.s32.totalorder %s56, %s59
      %p68 = scmp.eq.s32.totalorder %s25, 1
      %p69 = por %p67, %p68
      %p70 = scmp.ne.s32.totalorder %s59, %s60
      %p71 = scmp.eq.s32.totalorder %s25, 0
      %p72 = por %p70, %p71
      %p73 = scmp.ne.s32.totalorder %s59, %s60
      %p74 = scmp.eq.s32.totalorder %s26, 1
      %p75 = por %p73, %p74
      %p77 = scmp.ne.s32.totalorder %s60, %s76
      %p78 = scmp.eq.s32.totalorder %s26, 0
      %p79 = por %p77, %p78
      %s81 = sadd.s32 %s80, 1
      %p84 = scmp.eq.s32.totalorder %s20, 1
      %p85 = scmp.ne.s32.totalorder %s80, %s82
      %p86 = scmp.eq.s32.totalorder %s20, 0
      %p87 = por %p85, %p86
      %p88 = scmp.ne.s32.totalorder %s80, %s82
      %p89 = scmp.eq.s32.totalorder %s25, 1
      %p90 = por %p88, %p89
      %p91 = scmp.ne.s32.totalorder %s82, %s83
      %p92 = scmp.eq.s32.totalorder %s25, 0
      %p93 = por %p91, %p92
      %p94 = scmp.ne.s32.totalorder %s82, %s83
      %p95 = scmp.eq.s32.totalorder %s26, 1
      %p96 = por %p94, %p95
      %p98 = scmp.ne.s32.totalorder %s83, %s97
      %p99 = scmp.eq.s32.totalorder %s26, 0
      %p100 = por %p98, %p99
      %s102 = sadd.s32 %s101, 1
      %p105 = scmp.eq.s32.totalorder %s20, 1
      %p106 = scmp.ne.s32.totalorder %s101, %s103
      %p107 = scmp.eq.s32.totalorder %s20, 0
      %p108 = por %p106, %p107
      %p109 = scmp.ne.s32.totalorder %s101, %s103
      %p110 = scmp.eq.s32.totalorder %s25, 1
      %p111 = por %p109, %p110
      %p112 = scmp.ne.s32.totalorder %s103, %s104
      %p113 = scmp.eq.s32.totalorder %s25, 0
      %p114 = por %p112, %p113
      %p115 = scmp.ne.s32.totalorder %s103, %s104
      %p116 = scmp.eq.s32.totalorder %s26, 1
      %p117 = por %p115, %p116
      %p119 = scmp.ne.s32.totalorder %s104, %s118
      %p120 = scmp.eq.s32.totalorder %s26, 0
      %p121 = por %p119, %p120
      %s123 = sadd.s32 %s122, 1
      %p126 = scmp.eq.s32.totalorder %s20, 1
      %p127 = scmp.ne.s32.totalorder %s122, %s124
      %p128 = scmp.eq.s32.totalorder %s20, 0
      %p129 = por %p127, %p128
      %p130 = scmp.ne.s32.totalorder %s122, %s124
      %p131 = scmp.eq.s32.totalorder %s25, 1
      %p132 = por %p130, %p131
      %p133 = scmp.ne.s32.totalorder %s124, %s125
      %p134 = scmp.eq.s32.totalorder %s25, 0
      %p135 = por %p133, %p134
      %p136 = scmp.ne.s32.totalorder %s124, %s125
      %p137 = scmp.eq.s32.totalorder %s26, 1
      %p138 = por %p136, %p137
      %p140 = scmp.ne.s32.totalorder %s125, %s139
      %p141 = scmp.eq.s32.totalorder %s26, 0
      %p142 = por %p140, %p141
      %s143 = ssub.s32 %s20, %s27
      %p144 = scmp.eq.s32.totalorder %s143, 0
      %s146 = sadd.s32 %s145, 1
      %s147 = scalar_select %p144, %s145, %s146
      %p150 = pneg %p144
      %p151 = scmp.eq.s32.totalorder %s20, 1
      %p152 = por %p150, %p151
      %p153 = scmp.ne.s32.totalorder %s145, %s148
      %p154 = scmp.eq.s32.totalorder %s20, 0
      %p155 = por %p153, %p154
      %p156 = scmp.ne.s32.totalorder %s145, %s148
      %p157 = scmp.eq.s32.totalorder %s25, 1
      %p158 = por %p156, %p157
      %p159 = scmp.ne.s32.totalorder %s148, %s149
      %p160 = scmp.eq.s32.totalorder %s25, 0
      %p161 = por %p159, %p160
      %p162 = scmp.ne.s32.totalorder %s148, %s149
      %p163 = scmp.eq.s32.totalorder %s26, 1
      %p164 = por %p162, %p163
      %p166 = scmp.ne.s32.totalorder %s149, %s165
      %p167 = scmp.eq.s32.totalorder %s26, 0
      %p168 = por %p166, %p167
      %p169 = scmp.le.s32.totalorder 1, %s20
      %p170 = scmp.lt.s32.totalorder %s20, 3
      %p171 = pnand %p169, %p170
      %p172 = pneg %p171
      // Predicated region
      $region9: #{tpu_custom_call.1} parent=5 // pred_check
        _
      $region10: #{tpu_custom_call.1} parent=5 // pred_check_branch
        %174 = sbr.rel (%p171) target = $region12
      $region11: #{tpu_custom_call.1} parent=5 // pred_region
        %s175 = ssub.s32 %s20, 1
        // Predicated region
        $region13: #{tpu_custom_call.1} parent=11 // pred_check
          %p176 = pneg %p93
        $region14: #{tpu_custom_call.1} parent=11 // pred_check_branch
          %178 = sbr.rel (%p176) target = $region16
        $region15: #{tpu_custom_call.1} parent=11 // pred_region
          %180 = vsyncadd [#allocation8], 0
          %s182 = sshll.u32 %s2, 4
          %s183 = int_to_ptr.hbm [resolvable:$true] %s182
          %s184 = sshll.u32 [#allocation9], 4
          %s185 = int_to_ptr.vmem [resolvable:$true] %s184
          %187 = dma.hbm_to_vmem [thread:$0]  %s183, 512, %s185, [#allocation8]
        $region16: #{tpu_custom_call.1} parent=11 // pred_fallthru
          _
        // Predicated region
        $region17: #{tpu_custom_call.1} parent=11 // pred_check
          %p188 = pneg %p114
        $region18: #{tpu_custom_call.1} parent=11 // pred_check_branch
          %190 = sbr.rel (%p188) target = $region20
        $region19: #{tpu_custom_call.1} parent=11 // pred_region
          _
        $region20: #{tpu_custom_call.1} parent=11 // pred_fallthru
          _
        // Predicated region
        $region21: #{tpu_custom_call.1} parent=11 // pred_check
          %p191 = pneg %p135
        $region22: #{tpu_custom_call.1} parent=11 // pred_check_branch
          %193 = sbr.rel (%p191) target = $region24
        $region23: #{tpu_custom_call.1} parent=11 // pred_region
          _
        $region24: #{tpu_custom_call.1} parent=11 // pred_fallthru
          _
      $region12: #{tpu_custom_call.1} parent=5 // pred_fallthru
        _
      %p194 = scmp.lt.s32.totalorder %s20, 2
      // Predicated region
      $region25: #{tpu_custom_call.1} parent=5 // pred_check
        %p195 = pneg %p194
      $region26: #{tpu_custom_call.1} parent=5 // pred_check_branch
        %197 = sbr.rel (%p195) target = $region28
      $region27: #{tpu_custom_call.1} parent=5 // pred_region
        // Predicated region
        $region29: #{tpu_custom_call.1} parent=27 // pred_check
          %p198 = pneg %p40
        $region30: #{tpu_custom_call.1} parent=27 // pred_check_branch
          %200 = sbr.rel (%p198) target = $region32
        $region31: #{tpu_custom_call.1} parent=27 // pred_region
          %s201 = sand.u32 %s30, 1
          %s202 = scalar_lea.sflag [#allocation5], %s201
          %s203 = sand.u32 %s30, 1
          %s204 = smul.addr %s203, 64
          %s205 = scalar_lea.vmem [#allocation4], %s204
          %s206 = smul.u32 2, %s20
          %208 = vsyncadd %s202, 0
          %s209 = smul.addr %s206, 4
          %s210 = smul.addr %s209, 8
          %s211 = scalar_lea.hbm %s0, %s210
          %s212 = sshll.u32 %s211, 4
          %s213 = int_to_ptr.hbm [resolvable:$true] %s212
          %s214 = sshll.u32 %s205, 4
          %s215 = int_to_ptr.vmem [resolvable:$true] %s214
          %220 = dma.hbm_to_vmem [thread:$0]  %s213, 1024, %s215, %s202, 256, 256, 16
        $region32: #{tpu_custom_call.1} parent=27 // pred_fallthru
          _
        // Predicated region
        $region33: #{tpu_custom_call.1} parent=27 // pred_check
          %p221 = pneg %p66
        $region34: #{tpu_custom_call.1} parent=27 // pred_check_branch
          %223 = sbr.rel (%p221) target = $region36
        $region35: #{tpu_custom_call.1} parent=27 // pred_region
          %s224 = sand.u32 %s20, 1
          %s225 = scalar_lea.sflag [#allocation8], %s224
          %s226 = sand.u32 %s56, 1
          %s227 = smul.addr %s226, 64
          %s228 = scalar_lea.vmem [#allocation7], %s227
          %s229 = smul.u32 2, %s20
          %231 = vsyncadd %s225, 0
          %s232 = smul.addr %s229, 4
          %s233 = smul.addr %s232, 8
          %s234 = scalar_lea.hbm %s1, %s233
          %s235 = sshll.u32 %s234, 4
          %s236 = int_to_ptr.hbm [resolvable:$true] %s235
          %s237 = sshll.u32 %s228, 4
          %s238 = int_to_ptr.vmem [resolvable:$true] %s237
          %243 = dma.hbm_to_vmem [thread:$0]  %s236, 1024, %s238, %s225, 256, 256, 16
        $region36: #{tpu_custom_call.1} parent=27 // pred_fallthru
          _
      $region28: #{tpu_custom_call.1} parent=5 // pred_fallthru
        _
      %p244 = scmp.le.s32.totalorder 1, %s20
      %p245 = scmp.lt.s32.totalorder %s20, 3
      %p246 = pnand %p244, %p245
      %p247 = pneg %p246
      // Predicated region
      $region37: #{tpu_custom_call.1} parent=5 // pred_check
        _
      $region38: #{tpu_custom_call.1} parent=5 // pred_check_branch
        %249 = sbr.rel (%p246) target = $region40
      $region39: #{tpu_custom_call.1} parent=5 // pred_region
        %s250 = ssub.s32 %s20, 1
        %s251 = sand.u32 %s33, 1
        %s252 = scalar_lea.sflag [#allocation5], %s251
        %s253 = sand.u32 %s33, 1
        %s254 = smul.addr %s253, 64
        %s255 = scalar_lea.vmem [#allocation4], %s254
        // Predicated region
        $region41: #{tpu_custom_call.1} parent=39 // pred_check
          %p256 = pneg %p46
        $region42: #{tpu_custom_call.1} parent=39 // pred_check_branch
          %258 = sbr.rel (%p256) target = $region44
        $region43: #{tpu_custom_call.1} parent=39 // pred_region
          %260 = dma.done %s252, 1024
        $region44: #{tpu_custom_call.1} parent=39 // pred_fallthru
          _
        %s261 = sand.u32 %s25, 1
        %s262 = scalar_lea.sflag [#allocation8], %s261
        %s263 = sand.u32 %s59, 1
        %s264 = smul.addr %s263, 64
        %s265 = scalar_lea.vmem [#allocation7], %s264
        // Predicated region
        $region45: #{tpu_custom_call.1} parent=39 // pred_check
          %p266 = pneg %p72
        $region46: #{tpu_custom_call.1} parent=39 // pred_check_branch
          %268 = sbr.rel (%p266) target = $region48
        $region47: #{tpu_custom_call.1} parent=39 // pred_region
          %270 = dma.done %s262, 1024
        $region48: #{tpu_custom_call.1} parent=39 // pred_fallthru
          _
        // Predicated region
        $region49: #{tpu_custom_call.1} parent=39 // pred_check
          %p271 = pneg %p93
        $region50: #{tpu_custom_call.1} parent=39 // pred_check_branch
          %273 = sbr.rel (%p271) target = $region52
        $region51: #{tpu_custom_call.1} parent=39 // pred_region
          %275 = dma.done [#allocation8], 512
        $region52: #{tpu_custom_call.1} parent=39 // pred_fallthru
          _
        %s276 = sand.u32 %s33, 1
        %s277 = scalar_lea.sflag [#allocation5], %s276
        %s278 = sand.u32 %s33, 1
        %s279 = smul.addr %s278, 64
        %s280 = scalar_lea.vmem [#allocation4], %s279
        %p281 = pneg %p46
        %p282 = pneg %p43
        %s283 = sand.u32 %s25, 1
        %s284 = scalar_lea.sflag [#allocation8], %s283
        %s285 = sand.u32 %s59, 1
        %s286 = smul.addr %s285, 64
        %s287 = scalar_lea.vmem [#allocation7], %s286
        %p288 = pneg %p72
        %p289 = pneg %p69
        %p290 = pneg %p93
        %p291 = pneg %p90
        %p292 = pneg %p114
        %p293 = pneg %p111
        %p294 = pneg %p135
        %p295 = pneg %p132
        %p296 = pneg %p161
        %p297 = pneg %p158
        %s298 = sand.u32 %s148, 1
        %s299 = scalar_lea.sflag [#allocation6], %s298
        %s300 = sand.u32 %s148, 1
        %s301 = smul.addr %s300, 32
        %s302 = scalar_lea.vmem [#allocation10], %s301
        %s303 = smul.u32 2, %s25
        %s304 = smul.u32 2, %s25
        %s305 = smul.u32 2, %s25
        %v307 = vld [vmem:[%s255] sm:$0xff]
        %v308 = vld [vmem:[%s255 + $0x8] sm:$0xff]
        %v309 = vld [vmem:[%s255 + $0x10] sm:$0xff]
        %v310 = vld [vmem:[%s255 + $0x18] sm:$0xff]
        %v311 = vld [vmem:[%s265] sm:$0xff]
        %v312 = vld [vmem:[%s265 + $0x8] sm:$0xff]
        %v313 = vld [vmem:[%s265 + $0x10] sm:$0xff]
        %v314 = vld [vmem:[%s265 + $0x18] sm:$0xff]
        %v315 = vadd.f32 %v307, %v311
        %v316 = vadd.f32 %v308, %v312
        %v317 = vadd.f32 %v309, %v313
        %v318 = vadd.f32 %v310, %v314
        %319 = vst [vmem:[#allocation2 + $0x8] sm:$0xff] %v315
        %320 = vst [vmem:[#allocation2 + $0x10] sm:$0xff] %v316
        %321 = vst [vmem:[#allocation2 + $0x38] sm:$0xff] %v317
        %322 = vst [vmem:[#allocation2 + $0x40] sm:$0xff] %v318
        %s323 = scalar_lea.vmem %s255, 32 [#allocation4]
        %v324 = vld [vmem:[%s323] sm:$0xff]
        %v325 = vld [vmem:[%s323 + $0x8] sm:$0xff]
        %v326 = vld [vmem:[%s323 + $0x10] sm:$0xff]
        %v327 = vld [vmem:[%s323 + $0x18] sm:$0xff]
        %s328 = scalar_lea.vmem %s265, 32 [#allocation7]
        %v329 = vld [vmem:[%s328] sm:$0xff]
        %v330 = vld [vmem:[%s328 + $0x8] sm:$0xff]
        %v331 = vld [vmem:[%s328 + $0x10] sm:$0xff]
        %v332 = vld [vmem:[%s328 + $0x18] sm:$0xff]
        %v333 = vadd.f32 %v324, %v329
        %v334 = vadd.f32 %v325, %v330
        %v335 = vadd.f32 %v326, %v331
        %v336 = vadd.f32 %v327, %v332
        %337 = vst [vmem:[#allocation2 + $0x18] sm:$0xff] %v333
        %338 = vst [vmem:[#allocation2 + $0x20] sm:$0xff] %v334
        %339 = vst [vmem:[#allocation2 + $0x48] sm:$0xff] %v335
        %340 = vst [vmem:[#allocation2 + $0x50] sm:$0xff] %v336
        %v341 = vld [vmem:[#allocation2] sm:$0xff]
        %v342 = vld [vmem:[#allocation2 + $0x8] sm:$0xff]
        %v343 = vld [vmem:[#allocation2 + $0x10] sm:$0xff]
        %v344 = vld [vmem:[#allocation2 + $0x18] sm:$0xff]
        %v345 = vld [vmem:[#allocation2 + $0x20] sm:$0xff]
        %v346 = vld [vmem:[#allocation2 + $0x30] sm:$0xff]
        %v347 = vld [vmem:[#allocation2 + $0x38] sm:$0xff]
        %v348 = vld [vmem:[#allocation2 + $0x40] sm:$0xff]
        %v349 = vld [vmem:[#allocation2 + $0x48] sm:$0xff]
        %v350 = vld [vmem:[#allocation2 + $0x50] sm:$0xff]
        %v351 = vld [vmem:[#allocation9] ss:$8 sm:$0xf]
        %vm352 = vcmp.gt.f32.partialorder %v351, 0.0
        %v353 = vsel %vm352, 1, 0
        %v354 = vperm.slane %v353, 0
        %v355 = vperm.slane %v353, 1
        %v356 = vperm.slane %v353, 2
        %v357 = vperm.slane %v353, 3
        %vm358 = vcmp.eq.s32.totalorder %v354, 1
        %vm359 = vcmp.eq.s32.totalorder %v355, 1
        %vm360 = vcmp.eq.s32.totalorder %v356, 1
        %vm361 = vcmp.eq.s32.totalorder %v357, 1
        %372 = vrot.lane.b32.xlu0 %v341, 17
        %v373 = vpop.permute.xlu0 %372
        %374 = vrot.lane.b32.xlu0 %v342, 17
        %v375 = vpop.permute.xlu0 %374
        %376 = vrot.lane.b32.xlu0 %v343, 17
        %v377 = vpop.permute.xlu0 %376
        %378 = vrot.lane.b32.xlu0 %v344, 17
        %v379 = vpop.permute.xlu0 %378
        %380 = vrot.lane.b32.xlu0 %v345, 17
        %v381 = vpop.permute.xlu0 %380
        %382 = vrot.lane.b32.xlu0 %v346, 17
        %v383 = vpop.permute.xlu0 %382
        %384 = vrot.lane.b32.xlu0 %v347, 17
        %v385 = vpop.permute.xlu0 %384
        %386 = vrot.lane.b32.xlu0 %v348, 17
        %v387 = vpop.permute.xlu0 %386
        %388 = vrot.lane.b32.xlu0 %v349, 17
        %v389 = vpop.permute.xlu0 %388
        %390 = vrot.lane.b32.xlu0 %v350, 17
        %v391 = vpop.permute.xlu0 %390
        %vm392 = vcmask 138240
        %v393 = vsel %vm392, %v373, %v375
        %v394 = vsel %vm392, %v375, %v377
        %v395 = vsel %vm392, %v377, %v379
        %v396 = vsel %vm392, %v379, %v381
        %v397 = vsel %vm392, %v383, %v385
        %v398 = vsel %vm392, %v385, %v387
        %v399 = vsel %vm392, %v387, %v389
        %v400 = vsel %vm392, %v389, %v391
        %v409 = vsel %vm358, %v393, 0.0
        %v410 = vsel %vm359, %v394, 0.0
        %v411 = vsel %vm360, %v395, 0.0
        %v412 = vsel %vm361, %v396, 0.0
        %v413 = vsel %vm358, %v397, 0.0
        %v414 = vsel %vm359, %v398, 0.0
        %v415 = vsel %vm360, %v399, 0.0
        %v416 = vsel %vm361, %v400, 0.0
        %v417 = vpack.c.bf16 %v410, %v409
        %v418 = vpack.c.bf16 %v412, %v411
        %v419 = vpack.c.bf16 %v414, %v413
        %v420 = vpack.c.bf16 %v416, %v415
        %421 = vst [vmem:[#allocation3] sm:$0xff] %v417
        %422 = vst [vmem:[#allocation3 + $0x8] sm:$0xff] %v418
        %423 = vst [vmem:[#allocation3 + $0x10] sm:$0xff] %v419
        %424 = vst [vmem:[#allocation3 + $0x18] sm:$0xff] %v420
        %v425 = vld [vmem:[#allocation2] sm:$0xff]
        %v426 = vld [vmem:[#allocation2 + $0x8] sm:$0xff]
        %v427 = vld [vmem:[#allocation2 + $0x10] sm:$0xff]
        %v428 = vld [vmem:[#allocation2 + $0x18] sm:$0xff]
        %v429 = vld [vmem:[#allocation2 + $0x20] sm:$0xff]
        %v430 = vld [vmem:[#allocation2 + $0x30] sm:$0xff]
        %v431 = vld [vmem:[#allocation2 + $0x38] sm:$0xff]
        %v432 = vld [vmem:[#allocation2 + $0x40] sm:$0xff]
        %v433 = vld [vmem:[#allocation2 + $0x48] sm:$0xff]
        %v434 = vld [vmem:[#allocation2 + $0x50] sm:$0xff]
        %s435 = scalar_lea.vmem [#allocation9], 1
        %v436 = vld [vmem:[%s435] ss:$8 sm:$0xf]
        %vm437 = vcmp.gt.f32.partialorder %v436, 0.0
        %v438 = vsel %vm437, 1, 0
        %v439 = vperm.slane %v438, 0
        %v440 = vperm.slane %v438, 1
        %v441 = vperm.slane %v438, 2
        %v442 = vperm.slane %v438, 3
        %vm443 = vcmp.eq.s32.totalorder %v439, 1
        %vm444 = vcmp.eq.s32.totalorder %v440, 1
        %vm445 = vcmp.eq.s32.totalorder %v441, 1
        %vm446 = vcmp.eq.s32.totalorder %v442, 1
        %457 = vrot.lane.b32.xlu0 %v425, 16
        %v458 = vpop.permute.xlu0 %457
        %459 = vrot.lane.b32.xlu0 %v426, 16
        %v460 = vpop.permute.xlu0 %459
        %461 = vrot.lane.b32.xlu0 %v427, 16
        %v462 = vpop.permute.xlu0 %461
        %463 = vrot.lane.b32.xlu0 %v428, 16
        %v464 = vpop.permute.xlu0 %463
        %465 = vrot.lane.b32.xlu0 %v429, 16
        %v466 = vpop.permute.xlu0 %465
        %467 = vrot.lane.b32.xlu0 %v430, 16
        %v468 = vpop.permute.xlu0 %467
        %469 = vrot.lane.b32.xlu0 %v431, 16
        %v470 = vpop.permute.xlu0 %469
        %471 = vrot.lane.b32.xlu0 %v432, 16
        %v472 = vpop.permute.xlu0 %471
        %473 = vrot.lane.b32.xlu0 %v433, 16
        %v474 = vpop.permute.xlu0 %473
        %475 = vrot.lane.b32.xlu0 %v434, 16
        %v476 = vpop.permute.xlu0 %475
        %vm477 = vcmask 130048
        %v478 = vsel %vm477, %v458, %v460
        %v479 = vsel %vm477, %v460, %v462
        %v480 = vsel %vm477, %v462, %v464
        %v481 = vsel %vm477, %v464, %v466
        %v482 = vsel %vm477, %v468, %v470
        %v483 = vsel %vm477, %v470, %v472
        %v484 = vsel %vm477, %v472, %v474
        %v485 = vsel %vm477, %v474, %v476
        %v494 = vsel %vm443, %v478, 0.0
        %v495 = vsel %vm444, %v479, 0.0
        %v496 = vsel %vm445, %v480, 0.0
        %v497 = vsel %vm446, %v481, 0.0
        %v498 = vsel %vm443, %v482, 0.0
        %v499 = vsel %vm444, %v483, 0.0
        %v500 = vsel %vm445, %v484, 0.0
        %v501 = vsel %vm446, %v485, 0.0
        %v502 = vpack.c.bf16 %v495, %v494
        %v503 = vpack.c.bf16 %v497, %v496
        %v504 = vpack.c.bf16 %v499, %v498
        %v505 = vpack.c.bf16 %v501, %v500
        %506 = vst [vmem:[#allocation3 + $0x20] sm:$0xff] %v502
        %507 = vst [vmem:[#allocation3 + $0x28] sm:$0xff] %v503
        %508 = vst [vmem:[#allocation3 + $0x30] sm:$0xff] %v504
        %509 = vst [vmem:[#allocation3 + $0x38] sm:$0xff] %v505
        %v510 = vld [vmem:[#allocation2] sm:$0xff]
        %v511 = vld [vmem:[#allocation2 + $0x8] sm:$0xff]
        %v512 = vld [vmem:[#allocation2 + $0x10] sm:$0xff]
        %v513 = vld [vmem:[#allocation2 + $0x18] sm:$0xff]
        %v514 = vld [vmem:[#allocation2 + $0x20] sm:$0xff]
        %v515 = vld [vmem:[#allocation2 + $0x30] sm:$0xff]
        %v516 = vld [vmem:[#allocation2 + $0x38] sm:$0xff]
        %v517 = vld [vmem:[#allocation2 + $0x40] sm:$0xff]
        %v518 = vld [vmem:[#allocation2 + $0x48] sm:$0xff]
        %v519 = vld [vmem:[#allocation2 + $0x50] sm:$0xff]
        %s520 = scalar_lea.vmem [#allocation9], 2
        %v521 = vld [vmem:[%s520] ss:$8 sm:$0xf]
        %vm522 = vcmp.gt.f32.partialorder %v521, 0.0
        %v523 = vsel %vm522, 1, 0
        %v524 = vperm.slane %v523, 0
        %v525 = vperm.slane %v523, 1
        %v526 = vperm.slane %v523, 2
        %v527 = vperm.slane %v523, 3
        %vm528 = vcmp.eq.s32.totalorder %v524, 1
        %vm529 = vcmp.eq.s32.totalorder %v525, 1
        %vm530 = vcmp.eq.s32.totalorder %v526, 1
        %vm531 = vcmp.eq.s32.totalorder %v527, 1
        %542 = vrot.lane.b32.xlu0 %v510, 15
        %v543 = vpop.permute.xlu0 %542
        %544 = vrot.lane.b32.xlu0 %v511, 15
        %v545 = vpop.permute.xlu0 %544
        %546 = vrot.lane.b32.xlu0 %v512, 15
        %v547 = vpop.permute.xlu0 %546
        %548 = vrot.lane.b32.xlu0 %v513, 15
        %v549 = vpop.permute.xlu0 %548
        %550 = vrot.lane.b32.xlu0 %v514, 15
        %v551 = vpop.permute.xlu0 %550
        %552 = vrot.lane.b32.xlu0 %v515, 15
        %v553 = vpop.permute.xlu0 %552
        %554 = vrot.lane.b32.xlu0 %v516, 15
        %v555 = vpop.permute.xlu0 %554
        %556 = vrot.lane.b32.xlu0 %v517, 15
        %v557 = vpop.permute.xlu0 %556
        %558 = vrot.lane.b32.xlu0 %v518, 15
        %v559 = vpop.permute.xlu0 %558
        %560 = vrot.lane.b32.xlu0 %v519, 15
        %v561 = vpop.permute.xlu0 %560
        %vm562 = vcmask 121856
        %v563 = vsel %vm562, %v543, %v545
        %v564 = vsel %vm562, %v545, %v547
        %v565 = vsel %vm562, %v547, %v549
        %v566 = vsel %vm562, %v549, %v551
        %v567 = vsel %vm562, %v553, %v555
        %v568 = vsel %vm562, %v555, %v557
        %v569 = vsel %vm562, %v557, %v559
        %v570 = vsel %vm562, %v559, %v561
        %v579 = vsel %vm528, %v563, 0.0
        %v580 = vsel %vm529, %v564, 0.0
        %v581 = vsel %vm530, %v565, 0.0
        %v582 = vsel %vm531, %v566, 0.0
        %v583 = vsel %vm528, %v567, 0.0
        %v584 = vsel %vm529, %v568, 0.0
        %v585 = vsel %vm530, %v569, 0.0
        %v586 = vsel %vm531, %v570, 0.0
        %v587 = vpack.c.bf16 %v580, %v579
        %v588 = vpack.c.bf16 %v582, %v581
        %v589 = vpack.c.bf16 %v584, %v583
        %v590 = vpack.c.bf16 %v586, %v585
        %591 = vst [vmem:[#allocation3 + $0x40] sm:$0xff] %v587
        %592 = vst [vmem:[#allocation3 + $0x48] sm:$0xff] %v588
        %593 = vst [vmem:[#allocation3 + $0x50] sm:$0xff] %v589
        %594 = vst [vmem:[#allocation3 + $0x58] sm:$0xff] %v590
        %v595 = vld [vmem:[#allocation2] sm:$0xff]
        %v596 = vld [vmem:[#allocation2 + $0x8] sm:$0xff]
        %v597 = vld [vmem:[#allocation2 + $0x10] sm:$0xff]
        %v598 = vld [vmem:[#allocation2 + $0x18] sm:$0xff]
        %v599 = vld [vmem:[#allocation2 + $0x20] sm:$0xff]
        %v600 = vld [vmem:[#allocation2 + $0x30] sm:$0xff]
        %v601 = vld [vmem:[#allocation2 + $0x38] sm:$0xff]
        %v602 = vld [vmem:[#allocation2 + $0x40] sm:$0xff]
        %v603 = vld [vmem:[#allocation2 + $0x48] sm:$0xff]
        %v604 = vld [vmem:[#allocation2 + $0x50] sm:$0xff]
        %s605 = scalar_lea.vmem [#allocation9], 3
        %v606 = vld [vmem:[%s605] ss:$8 sm:$0xf]
        %vm607 = vcmp.gt.f32.partialorder %v606, 0.0
        %v608 = vsel %vm607, 1, 0
        %v609 = vperm.slane %v608, 0
        %v610 = vperm.slane %v608, 1
        %v611 = vperm.slane %v608, 2
        %v612 = vperm.slane %v608, 3
        %vm613 = vcmp.eq.s32.totalorder %v609, 1
        %vm614 = vcmp.eq.s32.totalorder %v610, 1
        %vm615 = vcmp.eq.s32.totalorder %v611, 1
        %vm616 = vcmp.eq.s32.totalorder %v612, 1
        %627 = vrot.lane.b32.xlu0 %v595, 1
        %v628 = vpop.permute.xlu0 %627
        %629 = vrot.lane.b32.xlu0 %v596, 1
        %v630 = vpop.permute.xlu0 %629
        %631 = vrot.lane.b32.xlu0 %v597, 1
        %v632 = vpop.permute.xlu0 %631
        %633 = vrot.lane.b32.xlu0 %v598, 1
        %v634 = vpop.permute.xlu0 %633
        %635 = vrot.lane.b32.xlu0 %v599, 1
        %v636 = vpop.permute.xlu0 %635
        %637 = vrot.lane.b32.xlu0 %v600, 1
        %v638 = vpop.permute.xlu0 %637
        %639 = vrot.lane.b32.xlu0 %v601, 1
        %v640 = vpop.permute.xlu0 %639
        %641 = vrot.lane.b32.xlu0 %v602, 1
        %v642 = vpop.permute.xlu0 %641
        %643 = vrot.lane.b32.xlu0 %v603, 1
        %v644 = vpop.permute.xlu0 %643
        %645 = vrot.lane.b32.xlu0 %v604, 1
        %v646 = vpop.permute.xlu0 %645
        %vm647 = vcmask 7168
        %v648 = vsel %vm647, %v628, %v630
        %v649 = vsel %vm647, %v630, %v632
        %v650 = vsel %vm647, %v632, %v634
        %v651 = vsel %vm647, %v634, %v636
        %v652 = vsel %vm647, %v638, %v640
        %v653 = vsel %vm647, %v640, %v642
        %v654 = vsel %vm647, %v642, %v644
        %v655 = vsel %vm647, %v644, %v646
        %v664 = vsel %vm613, %v648, 0.0
        %v665 = vsel %vm614, %v649, 0.0
        %v666 = vsel %vm615, %v650, 0.0
        %v667 = vsel %vm616, %v651, 0.0
        %v668 = vsel %vm613, %v652, 0.0
        %v669 = vsel %vm614, %v653, 0.0
        %v670 = vsel %vm615, %v654, 0.0
        %v671 = vsel %vm616, %v655, 0.0
        %v672 = vpack.c.bf16 %v665, %v664
        %v673 = vpack.c.bf16 %v667, %v666
        %v674 = vpack.c.bf16 %v669, %v668
        %v675 = vpack.c.bf16 %v671, %v670
        %676 = vst [vmem:[#allocation3 + $0x60] sm:$0xff] %v672
        %677 = vst [vmem:[#allocation3 + $0x68] sm:$0xff] %v673
        %678 = vst [vmem:[#allocation3 + $0x70] sm:$0xff] %v674
        %679 = vst [vmem:[#allocation3 + $0x78] sm:$0xff] %v675
        %v680 = vld [vmem:[#allocation2 + $0x8] sm:$0xff]
        %v681 = vld [vmem:[#allocation2 + $0x10] sm:$0xff]
        %v682 = vld [vmem:[#allocation2 + $0x18] sm:$0xff]
        %v683 = vld [vmem:[#allocation2 + $0x20] sm:$0xff]
        %v684 = vld [vmem:[#allocation2 + $0x38] sm:$0xff]
        %v685 = vld [vmem:[#allocation2 + $0x40] sm:$0xff]
        %v686 = vld [vmem:[#allocation2 + $0x48] sm:$0xff]
        %v687 = vld [vmem:[#allocation2 + $0x50] sm:$0xff]
        %v688 = vpack.c.bf16 %v681, %v680
        %v689 = vpack.c.bf16 %v683, %v682
        %v690 = vpack.c.bf16 %v685, %v684
        %v691 = vpack.c.bf16 %v687, %v686
        %692 = vst [vmem:[#allocation3 + $0x80] sm:$0xff] %v688
        %693 = vst [vmem:[#allocation3 + $0x88] sm:$0xff] %v689
        %694 = vst [vmem:[#allocation3 + $0x90] sm:$0xff] %v690
        %695 = vst [vmem:[#allocation3 + $0x98] sm:$0xff] %v691
        %v696 = vld [vmem:[#allocation2 + $0x8] sm:$0xff]
        %v697 = vld [vmem:[#allocation2 + $0x10] sm:$0xff]
        %v698 = vld [vmem:[#allocation2 + $0x18] sm:$0xff]
        %v699 = vld [vmem:[#allocation2 + $0x20] sm:$0xff]
        %v700 = vld [vmem:[#allocation2 + $0x28] sm:$0xff]
        %v701 = vld [vmem:[#allocation2 + $0x38] sm:$0xff]
        %v702 = vld [vmem:[#allocation2 + $0x40] sm:$0xff]
        %v703 = vld [vmem:[#allocation2 + $0x48] sm:$0xff]
        %v704 = vld [vmem:[#allocation2 + $0x50] sm:$0xff]
        %v705 = vld [vmem:[#allocation2 + $0x58] sm:$0xff]
        %s706 = scalar_lea.vmem [#allocation9], 4
        %v707 = vld [vmem:[%s706] ss:$8 sm:$0xf]
        %vm708 = vcmp.gt.f32.partialorder %v707, 0.0
        %v709 = vsel %vm708, 1, 0
        %v710 = vperm.slane %v709, 0
        %v711 = vperm.slane %v709, 1
        %v712 = vperm.slane %v709, 2
        %v713 = vperm.slane %v709, 3
        %vm714 = vcmp.eq.s32.totalorder %v710, 1
        %vm715 = vcmp.eq.s32.totalorder %v711, 1
        %vm716 = vcmp.eq.s32.totalorder %v712, 1
        %vm717 = vcmp.eq.s32.totalorder %v713, 1
        %728 = vrot.lane.b32.xlu0 %v696, 127
        %v729 = vpop.permute.xlu0 %728
        %730 = vrot.lane.b32.xlu0 %v697, 127
        %v731 = vpop.permute.xlu0 %730
        %732 = vrot.lane.b32.xlu0 %v698, 127
        %v733 = vpop.permute.xlu0 %732
        %734 = vrot.lane.b32.xlu0 %v699, 127
        %v735 = vpop.permute.xlu0 %734
        %736 = vrot.lane.b32.xlu0 %v700, 127
        %v737 = vpop.permute.xlu0 %736
        %738 = vrot.lane.b32.xlu0 %v701, 127
        %v739 = vpop.permute.xlu0 %738
        %740 = vrot.lane.b32.xlu0 %v702, 127
        %v741 = vpop.permute.xlu0 %740
        %742 = vrot.lane.b32.xlu0 %v703, 127
        %v743 = vpop.permute.xlu0 %742
        %744 = vrot.lane.b32.xlu0 %v704, 127
        %v745 = vpop.permute.xlu0 %744
        %746 = vrot.lane.b32.xlu0 %v705, 127
        %v747 = vpop.permute.xlu0 %746
        %vm748 = vcmask 1039360
        %v749 = vsel %vm748, %v729, %v731
        %v750 = vsel %vm748, %v731, %v733
        %v751 = vsel %vm748, %v733, %v735
        %v752 = vsel %vm748, %v735, %v737
        %v753 = vsel %vm748, %v739, %v741
        %v754 = vsel %vm748, %v741, %v743
        %v755 = vsel %vm748, %v743, %v745
        %v756 = vsel %vm748, %v745, %v747
        %v765 = vsel %vm714, %v749, 0.0
        %v766 = vsel %vm715, %v750, 0.0
        %v767 = vsel %vm716, %v751, 0.0
        %v768 = vsel %vm717, %v752, 0.0
        %v769 = vsel %vm714, %v753, 0.0
        %v770 = vsel %vm715, %v754, 0.0
        %v771 = vsel %vm716, %v755, 0.0
        %v772 = vsel %vm717, %v756, 0.0
        %v773 = vpack.c.bf16 %v766, %v765
        %v774 = vpack.c.bf16 %v768, %v767
        %v775 = vpack.c.bf16 %v770, %v769
        %v776 = vpack.c.bf16 %v772, %v771
        %777 = vst [vmem:[#allocation3 + $0xa0] sm:$0xff] %v773
        %778 = vst [vmem:[#allocation3 + $0xa8] sm:$0xff] %v774
        %779 = vst [vmem:[#allocation3 + $0xb0] sm:$0xff] %v775
        %780 = vst [vmem:[#allocation3 + $0xb8] sm:$0xff] %v776
        %v781 = vld [vmem:[#allocation2 + $0x8] sm:$0xff]
        %v782 = vld [vmem:[#allocation2 + $0x10] sm:$0xff]
        %v783 = vld [vmem:[#allocation2 + $0x18] sm:$0xff]
        %v784 = vld [vmem:[#allocation2 + $0x20] sm:$0xff]
        %v785 = vld [vmem:[#allocation2 + $0x28] sm:$0xff]
        %v786 = vld [vmem:[#allocation2 + $0x38] sm:$0xff]
        %v787 = vld [vmem:[#allocation2 + $0x40] sm:$0xff]
        %v788 = vld [vmem:[#allocation2 + $0x48] sm:$0xff]
        %v789 = vld [vmem:[#allocation2 + $0x50] sm:$0xff]
        %v790 = vld [vmem:[#allocation2 + $0x58] sm:$0xff]
        %s791 = scalar_lea.vmem [#allocation9], 5
        %v792 = vld [vmem:[%s791] ss:$8 sm:$0xf]
        %vm793 = vcmp.gt.f32.partialorder %v792, 0.0
        %v794 = vsel %vm793, 1, 0
        %v795 = vperm.slane %v794, 0
        %v796 = vperm.slane %v794, 1
        %v797 = vperm.slane %v794, 2
        %v798 = vperm.slane %v794, 3
        %vm799 = vcmp.eq.s32.totalorder %v795, 1
        %vm800 = vcmp.eq.s32.totalorder %v796, 1
        %vm801 = vcmp.eq.s32.totalorder %v797, 1
        %vm802 = vcmp.eq.s32.totalorder %v798, 1
        %813 = vrot.lane.b32.xlu0 %v781, 113
        %v814 = vpop.permute.xlu0 %813
        %815 = vrot.lane.b32.xlu0 %v782, 113
        %v816 = vpop.permute.xlu0 %815
        %817 = vrot.lane.b32.xlu0 %v783, 113
        %v818 = vpop.permute.xlu0 %817
        %819 = vrot.lane.b32.xlu0 %v784, 113
        %v820 = vpop.permute.xlu0 %819
        %821 = vrot.lane.b32.xlu0 %v785, 113
        %v822 = vpop.permute.xlu0 %821
        %823 = vrot.lane.b32.xlu0 %v786, 113
        %v824 = vpop.permute.xlu0 %823
        %825 = vrot.lane.b32.xlu0 %v787, 113
        %v826 = vpop.permute.xlu0 %825
        %827 = vrot.lane.b32.xlu0 %v788, 113
        %v828 = vpop.permute.xlu0 %827
        %829 = vrot.lane.b32.xlu0 %v789, 113
        %v830 = vpop.permute.xlu0 %829
        %831 = vrot.lane.b32.xlu0 %v790, 113
        %v832 = vpop.permute.xlu0 %831
        %vm833 = vcmask 924672
        %v834 = vsel %vm833, %v814, %v816
        %v835 = vsel %vm833, %v816, %v818
        %v836 = vsel %vm833, %v818, %v820
        %v837 = vsel %vm833, %v820, %v822
        %v838 = vsel %vm833, %v824, %v826
        %v839 = vsel %vm833, %v826, %v828
        %v840 = vsel %vm833, %v828, %v830
        %v841 = vsel %vm833, %v830, %v832
        %v850 = vsel %vm799, %v834, 0.0
        %v851 = vsel %vm800, %v835, 0.0
        %v852 = vsel %vm801, %v836, 0.0
        %v853 = vsel %vm802, %v837, 0.0
        %v854 = vsel %vm799, %v838, 0.0
        %v855 = vsel %vm800, %v839, 0.0
        %v856 = vsel %vm801, %v840, 0.0
        %v857 = vsel %vm802, %v841, 0.0
        %v858 = vpack.c.bf16 %v851, %v850
        %v859 = vpack.c.bf16 %v853, %v852
        %v860 = vpack.c.bf16 %v855, %v854
        %v861 = vpack.c.bf16 %v857, %v856
        %862 = vst [vmem:[#allocation3 + $0xc0] sm:$0xff] %v858
        %863 = vst [vmem:[#allocation3 + $0xc8] sm:$0xff] %v859
        %864 = vst [vmem:[#allocation3 + $0xd0] sm:$0xff] %v860
        %865 = vst [vmem:[#allocation3 + $0xd8] sm:$0xff] %v861
        %v866 = vld [vmem:[#allocation2 + $0x8] sm:$0xff]
        %v867 = vld [vmem:[#allocation2 + $0x10] sm:$0xff]
        %v868 = vld [vmem:[#allocation2 + $0x18] sm:$0xff]
        %v869 = vld [vmem:[#allocation2 + $0x20] sm:$0xff]
        %v870 = vld [vmem:[#allocation2 + $0x28] sm:$0xff]
        %v871 = vld [vmem:[#allocation2 + $0x38] sm:$0xff]
        %v872 = vld [vmem:[#allocation2 + $0x40] sm:$0xff]
        %v873 = vld [vmem:[#allocation2 + $0x48] sm:$0xff]
        %v874 = vld [vmem:[#allocation2 + $0x50] sm:$0xff]
        %v875 = vld [vmem:[#allocation2 + $0x58] sm:$0xff]
        %s876 = scalar_lea.vmem [#allocation9], 6
        %v877 = vld [vmem:[%s876] ss:$8 sm:$0xf]
        %vm878 = vcmp.gt.f32.partialorder %v877, 0.0
        %v879 = vsel %vm878, 1, 0
        %v880 = vperm.slane %v879, 0
        %v881 = vperm.slane %v879, 1
        %v882 = vperm.slane %v879, 2
        %v883 = vperm.slane %v879, 3
        %vm884 = vcmp.eq.s32.totalorder %v880, 1
        %vm885 = vcmp.eq.s32.totalorder %v881, 1
        %vm886 = vcmp.eq.s32.totalorder %v882, 1
        %vm887 = vcmp.eq.s32.totalorder %v883, 1
        %898 = vrot.lane.b32.xlu0 %v866, 112
        %v899 = vpop.permute.xlu0 %898
        %900 = vrot.lane.b32.xlu0 %v867, 112
        %v901 = vpop.permute.xlu0 %900
        %902 = vrot.lane.b32.xlu0 %v868, 112
        %v903 = vpop.permute.xlu0 %902
        %904 = vrot.lane.b32.xlu0 %v869, 112
        %v905 = vpop.permute.xlu0 %904
        %906 = vrot.lane.b32.xlu0 %v870, 112
        %v907 = vpop.permute.xlu0 %906
        %908 = vrot.lane.b32.xlu0 %v871, 112
        %v909 = vpop.permute.xlu0 %908
        %910 = vrot.lane.b32.xlu0 %v872, 112
        %v911 = vpop.permute.xlu0 %910
        %912 = vrot.lane.b32.xlu0 %v873, 112
        %v913 = vpop.permute.xlu0 %912
        %914 = vrot.lane.b32.xlu0 %v874, 112
        %v915 = vpop.permute.xlu0 %914
        %916 = vrot.lane.b32.xlu0 %v875, 112
        %v917 = vpop.permute.xlu0 %916
        %vm918 = vcmask 916480
        %v919 = vsel %vm918, %v899, %v901
        %v920 = vsel %vm918, %v901, %v903
        %v921 = vsel %vm918, %v903, %v905
        %v922 = vsel %vm918, %v905, %v907
        %v923 = vsel %vm918, %v909, %v911
        %v924 = vsel %vm918, %v911, %v913
        %v925 = vsel %vm918, %v913, %v915
        %v926 = vsel %vm918, %v915, %v917
        %v935 = vsel %vm884, %v919, 0.0
        %v936 = vsel %vm885, %v920, 0.0
        %v937 = vsel %vm886, %v921, 0.0
        %v938 = vsel %vm887, %v922, 0.0
        %v939 = vsel %vm884, %v923, 0.0
        %v940 = vsel %vm885, %v924, 0.0
        %v941 = vsel %vm886, %v925, 0.0
        %v942 = vsel %vm887, %v926, 0.0
        %v943 = vpack.c.bf16 %v936, %v935
        %v944 = vpack.c.bf16 %v938, %v937
        %v945 = vpack.c.bf16 %v940, %v939
        %v946 = vpack.c.bf16 %v942, %v941
        %947 = vst [vmem:[#allocation3 + $0xe0] sm:$0xff] %v943
        %948 = vst [vmem:[#allocation3 + $0xe8] sm:$0xff] %v944
        %949 = vst [vmem:[#allocation3 + $0xf0] sm:$0xff] %v945
        %950 = vst [vmem:[#allocation3 + $0xf8] sm:$0xff] %v946
        %v951 = vld [vmem:[#allocation2 + $0x8] sm:$0xff]
        %v952 = vld [vmem:[#allocation2 + $0x10] sm:$0xff]
        %v953 = vld [vmem:[#allocation2 + $0x18] sm:$0xff]
        %v954 = vld [vmem:[#allocation2 + $0x20] sm:$0xff]
        %v955 = vld [vmem:[#allocation2 + $0x28] sm:$0xff]
        %v956 = vld [vmem:[#allocation2 + $0x38] sm:$0xff]
        %v957 = vld [vmem:[#allocation2 + $0x40] sm:$0xff]
        %v958 = vld [vmem:[#allocation2 + $0x48] sm:$0xff]
        %v959 = vld [vmem:[#allocation2 + $0x50] sm:$0xff]
        %v960 = vld [vmem:[#allocation2 + $0x58] sm:$0xff]
        %s961 = scalar_lea.vmem [#allocation9], 7
        %v962 = vld [vmem:[%s961] ss:$8 sm:$0xf]
        %vm963 = vcmp.gt.f32.partialorder %v962, 0.0
        %v964 = vsel %vm963, 1, 0
        %v965 = vperm.slane %v964, 0
        %v966 = vperm.slane %v964, 1
        %v967 = vperm.slane %v964, 2
        %v968 = vperm.slane %v964, 3
        %vm969 = vcmp.eq.s32.totalorder %v965, 1
        %vm970 = vcmp.eq.s32.totalorder %v966, 1
        %vm971 = vcmp.eq.s32.totalorder %v967, 1
        %vm972 = vcmp.eq.s32.totalorder %v968, 1
        %983 = vrot.lane.b32.xlu0 %v951, 111
        %v984 = vpop.permute.xlu0 %983
        %985 = vrot.lane.b32.xlu0 %v952, 111
        %v986 = vpop.permute.xlu0 %985
        %987 = vrot.lane.b32.xlu0 %v953, 111
        %v988 = vpop.permute.xlu0 %987
        %989 = vrot.lane.b32.xlu0 %v954, 111
        %v990 = vpop.permute.xlu0 %989
        %991 = vrot.lane.b32.xlu0 %v955, 111
        %v992 = vpop.permute.xlu0 %991
        %993 = vrot.lane.b32.xlu0 %v956, 111
        %v994 = vpop.permute.xlu0 %993
        %995 = vrot.lane.b32.xlu0 %v957, 111
        %v996 = vpop.permute.xlu0 %995
        %997 = vrot.lane.b32.xlu0 %v958, 111
        %v998 = vpop.permute.xlu0 %997
        %999 = vrot.lane.b32.xlu0 %v959, 111
        %v1000 = vpop.permute.xlu0 %999
        %1001 = vrot.lane.b32.xlu0 %v960, 111
        %v1002 = vpop.permute.xlu0 %1001
        %vm1003 = vcmask 908288
        %v1004 = vsel %vm1003, %v984, %v986
        %v1005 = vsel %vm1003, %v986, %v988
        %v1006 = vsel %vm1003, %v988, %v990
        %v1007 = vsel %vm1003, %v990, %v992
        %v1008 = vsel %vm1003, %v994, %v996
        %v1009 = vsel %vm1003, %v996, %v998
        %v1010 = vsel %vm1003, %v998, %v1000
        %v1011 = vsel %vm1003, %v1000, %v1002
        %v1020 = vsel %vm969, %v1004, 0.0
        %v1021 = vsel %vm970, %v1005, 0.0
        %v1022 = vsel %vm971, %v1006, 0.0
        %v1023 = vsel %vm972, %v1007, 0.0
        %v1024 = vsel %vm969, %v1008, 0.0
        %v1025 = vsel %vm970, %v1009, 0.0
        %v1026 = vsel %vm971, %v1010, 0.0
        %v1027 = vsel %vm972, %v1011, 0.0
        %v1028 = vpack.c.bf16 %v1021, %v1020
        %v1029 = vpack.c.bf16 %v1023, %v1022
        %v1030 = vpack.c.bf16 %v1025, %v1024
        %v1031 = vpack.c.bf16 %v1027, %v1026
        %1032 = vst [vmem:[#allocation3 + $0x100] sm:$0xff] %v1028
        %1033 = vst [vmem:[#allocation3 + $0x108] sm:$0xff] %v1029
        %1034 = vst [vmem:[#allocation3 + $0x110] sm:$0xff] %v1030
        %1035 = vst [vmem:[#allocation3 + $0x118] sm:$0xff] %v1031
        %v1036 = vld [vmem:[%s3] sm:$0xff]
        %v1037 = vld [vmem:[#allocation3] sm:$0xff]
        %v1038 = vld [vmem:[#allocation3 + $0x8] sm:$0xff]
        %v1039 = vld [vmem:[#allocation3 + $0x10] sm:$0xff]
        %v1040 = vld [vmem:[#allocation3 + $0x18] sm:$0xff]
        %v1041 = vld [vmem:[#allocation3 + $0x20] sm:$0xff]
        %v1042 = vld [vmem:[#allocation3 + $0x28] sm:$0xff]
        %v1043 = vld [vmem:[#allocation3 + $0x30] sm:$0xff]
        %v1044 = vld [vmem:[#allocation3 + $0x38] sm:$0xff]
        %v1045 = vld [vmem:[#allocation3 + $0x40] sm:$0xff]
        %v1046 = vld [vmem:[#allocation3 + $0x48] sm:$0xff]
        %v1047 = vld [vmem:[#allocation3 + $0x50] sm:$0xff]
        %v1048 = vld [vmem:[#allocation3 + $0x58] sm:$0xff]
        %v1049 = vld [vmem:[#allocation3 + $0x60] sm:$0xff]
        %v1050 = vld [vmem:[#allocation3 + $0x68] sm:$0xff]
        %v1051 = vld [vmem:[#allocation3 + $0x70] sm:$0xff]
        %v1052 = vld [vmem:[#allocation3 + $0x78] sm:$0xff]
        %v1053 = vld [vmem:[#allocation3 + $0x80] sm:$0xff]
        %v1054 = vld [vmem:[#allocation3 + $0x88] sm:$0xff]
        %v1055 = vld [vmem:[#allocation3 + $0x90] sm:$0xff]
        %v1056 = vld [vmem:[#allocation3 + $0x98] sm:$0xff]
        %v1057 = vld [vmem:[#allocation3 + $0xa0] sm:$0xff]
        %v1058 = vld [vmem:[#allocation3 + $0xa8] sm:$0xff]
        %v1059 = vld [vmem:[#allocation3 + $0xb0] sm:$0xff]
        %v1060 = vld [vmem:[#allocation3 + $0xb8] sm:$0xff]
        %v1061 = vld [vmem:[#allocation3 + $0xc0] sm:$0xff]
        %v1062 = vld [vmem:[#allocation3 + $0xc8] sm:$0xff]
        %v1063 = vld [vmem:[#allocation3 + $0xd0] sm:$0xff]
        %v1064 = vld [vmem:[#allocation3 + $0xd8] sm:$0xff]
        %v1065 = vld [vmem:[#allocation3 + $0xe0] sm:$0xff]
        %v1066 = vld [vmem:[#allocation3 + $0xe8] sm:$0xff]
        %v1067 = vld [vmem:[#allocation3 + $0xf0] sm:$0xff]
        %v1068 = vld [vmem:[#allocation3 + $0xf8] sm:$0xff]
        %v1069 = vld [vmem:[#allocation3 + $0x100] sm:$0xff]
        %v1070 = vld [vmem:[#allocation3 + $0x108] sm:$0xff]
        %v1071 = vld [vmem:[#allocation3 + $0x110] sm:$0xff]
        %v1072 = vld [vmem:[#allocation3 + $0x118] sm:$0xff]
        %v1074 = vunpack.c.l.b16 %v1036
        %v1075 = vunpack.c.h.b16 %v1036
        %v1076 = vpack.c.b16 %v1074, %v1074
        %v1077 = vpack.c.b16 %v1075, %v1075
        %v1115 = vunpack.c.l.b16 %v1037
        %v1116 = vunpack.c.h.b16 %v1037
        %v1117 = vunpack.c.l.b16 %v1038
        %v1118 = vunpack.c.h.b16 %v1038
        %v1119 = vunpack.c.l.b16 %v1039
        %v1120 = vunpack.c.h.b16 %v1039
        %v1121 = vunpack.c.l.b16 %v1040
        %v1122 = vunpack.c.h.b16 %v1040
        %v1123 = vunpack.c.l.b16 %v1041
        %v1124 = vunpack.c.h.b16 %v1041
        %v1125 = vunpack.c.l.b16 %v1042
        %v1126 = vunpack.c.h.b16 %v1042
        %v1127 = vunpack.c.l.b16 %v1043
        %v1128 = vunpack.c.h.b16 %v1043
        %v1129 = vunpack.c.l.b16 %v1044
        %v1130 = vunpack.c.h.b16 %v1044
        %v1131 = vunpack.c.l.b16 %v1045
        %v1132 = vunpack.c.h.b16 %v1045
        %v1133 = vunpack.c.l.b16 %v1046
        %v1134 = vunpack.c.h.b16 %v1046
        %v1135 = vunpack.c.l.b16 %v1047
        %v1136 = vunpack.c.h.b16 %v1047
        %v1137 = vunpack.c.l.b16 %v1048
        %v1138 = vunpack.c.h.b16 %v1048
        %v1139 = vunpack.c.l.b16 %v1049
        %v1140 = vunpack.c.h.b16 %v1049
        %v1141 = vunpack.c.l.b16 %v1050
        %v1142 = vunpack.c.h.b16 %v1050
        %v1143 = vunpack.c.l.b16 %v1051
        %v1144 = vunpack.c.h.b16 %v1051
        %v1145 = vunpack.c.l.b16 %v1052
        %v1146 = vunpack.c.h.b16 %v1052
        %v1147 = vunpack.c.l.b16 %v1053
        %v1148 = vunpack.c.h.b16 %v1053
        %v1149 = vunpack.c.l.b16 %v1054
        %v1150 = vunpack.c.h.b16 %v1054
        %v1151 = vunpack.c.l.b16 %v1055
        %v1152 = vunpack.c.h.b16 %v1055
        %v1153 = vunpack.c.l.b16 %v1056
        %v1154 = vunpack.c.h.b16 %v1056
        %v1155 = vunpack.c.l.b16 %v1057
        %v1156 = vunpack.c.h.b16 %v1057
        %v1157 = vunpack.c.l.b16 %v1058
        %v1158 = vunpack.c.h.b16 %v1058
        %v1159 = vunpack.c.l.b16 %v1059
        %v1160 = vunpack.c.h.b16 %v1059
        %v1161 = vunpack.c.l.b16 %v1060
        %v1162 = vunpack.c.h.b16 %v1060
        %v1163 = vunpack.c.l.b16 %v1061
        %v1164 = vunpack.c.h.b16 %v1061
        %v1165 = vunpack.c.l.b16 %v1062
        %v1166 = vunpack.c.h.b16 %v1062
        %v1167 = vunpack.c.l.b16 %v1063
        %v1168 = vunpack.c.h.b16 %v1063
        %v1169 = vunpack.c.l.b16 %v1064
        %v1170 = vunpack.c.h.b16 %v1064
        %v1171 = vunpack.c.l.b16 %v1065
        %v1172 = vunpack.c.h.b16 %v1065
        %v1173 = vunpack.c.l.b16 %v1066
        %v1174 = vunpack.c.h.b16 %v1066
        %v1175 = vunpack.c.l.b16 %v1067
        %v1176 = vunpack.c.h.b16 %v1067
        %v1177 = vunpack.c.l.b16 %v1068
        %v1178 = vunpack.c.h.b16 %v1068
        %v1179 = vunpack.c.l.b16 %v1069
        %v1180 = vunpack.c.h.b16 %v1069
        %v1181 = vunpack.c.l.b16 %v1070
        %v1182 = vunpack.c.h.b16 %v1070
        %v1183 = vunpack.c.l.b16 %v1071
        %v1184 = vunpack.c.h.b16 %v1071
        %v1185 = vunpack.c.l.b16 %v1072
        %v1186 = vunpack.c.h.b16 %v1072
        %v1187 = vpack.c.b16 %v1119, %v1115
        %v1188 = vpack.c.b16 %v1120, %v1116
        %v1189 = vpack.c.b16 %v1121, %v1117
        %v1190 = vpack.c.b16 %v1122, %v1118
        %v1191 = vpack.c.b16 %v1127, %v1123
        %v1192 = vpack.c.b16 %v1128, %v1124
        %v1193 = vpack.c.b16 %v1129, %v1125
        %v1194 = vpack.c.b16 %v1130, %v1126
        %v1195 = vpack.c.b16 %v1135, %v1131
        %v1196 = vpack.c.b16 %v1136, %v1132
        %v1197 = vpack.c.b16 %v1137, %v1133
        %v1198 = vpack.c.b16 %v1138, %v1134
        %v1199 = vpack.c.b16 %v1143, %v1139
        %v1200 = vpack.c.b16 %v1144, %v1140
        %v1201 = vpack.c.b16 %v1145, %v1141
        %v1202 = vpack.c.b16 %v1146, %v1142
        %v1203 = vpack.c.b16 %v1151, %v1147
        %v1204 = vpack.c.b16 %v1152, %v1148
        %v1205 = vpack.c.b16 %v1153, %v1149
        %v1206 = vpack.c.b16 %v1154, %v1150
        %v1207 = vpack.c.b16 %v1159, %v1155
        %v1208 = vpack.c.b16 %v1160, %v1156
        %v1209 = vpack.c.b16 %v1161, %v1157
        %v1210 = vpack.c.b16 %v1162, %v1158
        %v1211 = vpack.c.b16 %v1167, %v1163
        %v1212 = vpack.c.b16 %v1168, %v1164
        %v1213 = vpack.c.b16 %v1169, %v1165
        %v1214 = vpack.c.b16 %v1170, %v1166
        %v1215 = vpack.c.b16 %v1175, %v1171
        %v1216 = vpack.c.b16 %v1176, %v1172
        %v1217 = vpack.c.b16 %v1177, %v1173
        %v1218 = vpack.c.b16 %v1178, %v1174
        %v1219 = vpack.c.b16 %v1183, %v1179
        %v1220 = vpack.c.b16 %v1184, %v1180
        %v1221 = vpack.c.b16 %v1185, %v1181
        %v1222 = vpack.c.b16 %v1186, %v1182
        %v1260 = vsel %vm477, %v1077, 0
        %1262 = vmatpush.bf16.msra.mxu0 %v1215
        %1263 = vmatpush.bf16.msra.mxu0 %v1211
        %1264 = vmatpush.bf16.msra.mxu0 %v1207
        %1265 = vmatpush.bf16.msra.mxu0 %v1203
        %1266 = vmatpush.bf16.msra.mxu0 %v1199
        %1267 = vmatpush.bf16.msra.mxu0 %v1195
        %1268 = vmatpush.bf16.msra.mxu0 %v1191
        %1269 = vmatpush.bf16.msra.mxu0 %v1187
        %1270 = vmatmul.bf16.gmra.mxu0 %v1076
        %v1271 = vpop.f32.mrf.mxu0
        %v1272 = vadd.f32 0.0, %v1271
        %v1273 = vpop.f32.mrf.mxu0
        %1274 = vdwg.mxu0
        %1275 = vmatpush.bf16.msra.mxu0 0
        %1276 = vmatpush.bf16.msra.mxu0 0
        %1277 = vmatpush.bf16.msra.mxu0 0
        %1278 = vmatpush.bf16.msra.mxu0 0
        %1279 = vmatpush.bf16.msra.mxu0 0
        %1280 = vmatpush.bf16.msra.mxu0 0
        %1281 = vmatpush.bf16.msra.mxu0 0
        %1282 = vmatpush.bf16.msra.mxu0 %v1219
        %1283 = vmatmul.bf16.gmra.mxu0 %v1260
        %v1284 = vpop.f32.mrf.mxu0
        %v1285 = vadd.f32 %v1272, %v1284
        %v1286 = vpop.f32.mrf.mxu0
        %1287 = vdwg.mxu0
        %1288 = vmatpush.bf16.msra.mxu0 %v1216
        %1289 = vmatpush.bf16.msra.mxu0 %v1212
        %1290 = vmatpush.bf16.msra.mxu0 %v1208
        %1291 = vmatpush.bf16.msra.mxu0 %v1204
        %1292 = vmatpush.bf16.msra.mxu0 %v1200
        %1293 = vmatpush.bf16.msra.mxu0 %v1196
        %1294 = vmatpush.bf16.msra.mxu0 %v1192
        %1295 = vmatpush.bf16.msra.mxu0 %v1188
        %1296 = vmatmul.bf16.gmra.mxu0 %v1076
        %v1297 = vpop.f32.mrf.mxu0
        %v1298 = vadd.f32 0.0, %v1297
        %v1299 = vpop.f32.mrf.mxu0
        %1300 = vdwg.mxu0
        %1301 = vmatpush.bf16.msra.mxu0 0
        %1302 = vmatpush.bf16.msra.mxu0 0
        %1303 = vmatpush.bf16.msra.mxu0 0
        %1304 = vmatpush.bf16.msra.mxu0 0
        %1305 = vmatpush.bf16.msra.mxu0 0
        %1306 = vmatpush.bf16.msra.mxu0 0
        %1307 = vmatpush.bf16.msra.mxu0 0
        %1308 = vmatpush.bf16.msra.mxu0 %v1220
        %1309 = vmatmul.bf16.gmra.mxu0 %v1260
        %v1310 = vpop.f32.mrf.mxu0
        %v1311 = vadd.f32 %v1298, %v1310
        %v1312 = vpop.f32.mrf.mxu0
        %1313 = vdwg.mxu0
        %1314 = vmatpush.bf16.msra.mxu0 %v1217
        %1315 = vmatpush.bf16.msra.mxu0 %v1213
        %1316 = vmatpush.bf16.msra.mxu0 %v1209
        %1317 = vmatpush.bf16.msra.mxu0 %v1205
        %1318 = vmatpush.bf16.msra.mxu0 %v1201
        %1319 = vmatpush.bf16.msra.mxu0 %v1197
        %1320 = vmatpush.bf16.msra.mxu0 %v1193
        %1321 = vmatpush.bf16.msra.mxu0 %v1189
        %1322 = vmatmul.bf16.gmra.mxu0 %v1076
        %v1323 = vpop.f32.mrf.mxu0
        %v1324 = vadd.f32 0.0, %v1323
        %v1325 = vpop.f32.mrf.mxu0
        %1326 = vdwg.mxu0
        %1327 = vmatpush.bf16.msra.mxu0 0
        %1328 = vmatpush.bf16.msra.mxu0 0
        %1329 = vmatpush.bf16.msra.mxu0 0
        %1330 = vmatpush.bf16.msra.mxu0 0
        %1331 = vmatpush.bf16.msra.mxu0 0
        %1332 = vmatpush.bf16.msra.mxu0 0
        %1333 = vmatpush.bf16.msra.mxu0 0
        %1334 = vmatpush.bf16.msra.mxu0 %v1221
        %1335 = vmatmul.bf16.gmra.mxu0 %v1260
        %v1336 = vpop.f32.mrf.mxu0
        %v1337 = vadd.f32 %v1324, %v1336
        %v1338 = vpop.f32.mrf.mxu0
        %1339 = vdwg.mxu0
        %1340 = vmatpush.bf16.msra.mxu0 %v1218
        %1341 = vmatpush.bf16.msra.mxu0 %v1214
        %1342 = vmatpush.bf16.msra.mxu0 %v1210
        %1343 = vmatpush.bf16.msra.mxu0 %v1206
        %1344 = vmatpush.bf16.msra.mxu0 %v1202
        %1345 = vmatpush.bf16.msra.mxu0 %v1198
        %1346 = vmatpush.bf16.msra.mxu0 %v1194
        %1347 = vmatpush.bf16.msra.mxu0 %v1190
        %1348 = vmatmul.bf16.gmra.mxu0 %v1076
        %v1349 = vpop.f32.mrf.mxu0
        %v1350 = vadd.f32 0.0, %v1349
        %v1351 = vpop.f32.mrf.mxu0
        %1352 = vdwg.mxu0
        %1353 = vmatpush.bf16.msra.mxu0 0
        %1354 = vmatpush.bf16.msra.mxu0 0
        %1355 = vmatpush.bf16.msra.mxu0 0
        %1356 = vmatpush.bf16.msra.mxu0 0
        %1357 = vmatpush.bf16.msra.mxu0 0
        %1358 = vmatpush.bf16.msra.mxu0 0
        %1359 = vmatpush.bf16.msra.mxu0 0
        %1360 = vmatpush.bf16.msra.mxu0 %v1222
        %1361 = vmatmul.bf16.gmra.mxu0 %v1260
        %v1362 = vpop.f32.mrf.mxu0
        %v1363 = vadd.f32 %v1350, %v1362
        %v1364 = vpop.f32.mrf.mxu0
        %1365 = vdwg.mxu0
        %v1366 = vld [vmem:[%s4] sm:$0xff]
        %1368 = vset.pattern.permute.xlu0 0
        %1369 = vperm.xlu0 %1368, %v1366
        %v1370 = vpop.permute.xlu0 %1369
        %v1372 = vadd.f32 %v1285, %v1370
        %v1373 = vadd.f32 %v1311, %v1370
        %1374 = vst [vmem:[%s302] sm:$0xff] %v1372
        %1375 = vst [vmem:[%s302 + $0x8] sm:$0xff] %v1373
        %v1376 = vadd.f32 %v1337, %v1370
        %v1377 = vadd.f32 %v1363, %v1370
        %s1378 = scalar_lea.vmem %s302, 16 [#allocation10]
        %1379 = vst [vmem:[%s1378] sm:$0xff] %v1376
        %1380 = vst [vmem:[%s1378 + $0x8] sm:$0xff] %v1377
        %s1381 = sand.u32 %s148, 1
        %s1382 = scalar_lea.sflag [#allocation6], %s1381
        %s1383 = sand.u32 %s148, 1
        %s1384 = smul.addr %s1383, 32
        %s1385 = scalar_lea.vmem [#allocation10], %s1384
        // Predicated region
        $region53: #{tpu_custom_call.1} parent=39 // pred_check
          %p1386 = pneg %p158
        $region54: #{tpu_custom_call.1} parent=39 // pred_check_branch
          %1388 = sbr.rel (%p1386) target = $region56
        $region55: #{tpu_custom_call.1} parent=39 // pred_region
          %s1389 = smul.u32 2, %s25
          %1391 = vsyncadd %s1382, 0
          %s1392 = smul.addr %s1389, 2
          %s1393 = smul.addr %s1392, 8
          %s1394 = scalar_lea.hbm %s5, %s1393
          %s1395 = sshll.u32 %s1385, 4
          %s1396 = int_to_ptr.vmem [resolvable:$true] %s1395
          %s1397 = sshll.u32 %s1394, 4
          %s1398 = int_to_ptr.hbm [resolvable:$true] %s1397
          %1403 = dma.vmem_to_hbm [thread:$0]  %s1396, 512, %s1398, %s1382, 256, 256, 16
        $region56: #{tpu_custom_call.1} parent=39 // pred_fallthru
          _
      $region40: #{tpu_custom_call.1} parent=5 // pred_fallthru
        _
      %p1404 = scmp.le.s32.totalorder 2, %s20
      // Predicated region
      $region57: #{tpu_custom_call.1} parent=5 // pred_check
        %p1405 = pneg %p1404
      $region58: #{tpu_custom_call.1} parent=5 // pred_check_branch
        %1407 = sbr.rel (%p1405) target = $region60
      $region59: #{tpu_custom_call.1} parent=5 // pred_region
        %s1408 = ssub.s32 %s20, 2
        // Predicated region
        $region61: #{tpu_custom_call.1} parent=59 // pred_check
          %p1409 = pneg %p164
        $region62: #{tpu_custom_call.1} parent=59 // pred_check_branch
          %1411 = sbr.rel (%p1409) target = $region64
        $region63: #{tpu_custom_call.1} parent=59 // pred_region
          %s1412 = sand.u32 %s149, 1
          %s1413 = scalar_lea.sflag [#allocation6], %s1412
          %s1414 = sand.u32 %s149, 1
          %s1415 = smul.addr %s1414, 32
          %s1416 = scalar_lea.vmem [#allocation10], %s1415
          %1418 = dma.done %s1413, 512
        $region64: #{tpu_custom_call.1} parent=59 // pred_fallthru
          _
      $region60: #{tpu_custom_call.1} parent=5 // pred_fallthru
        _
    $region6: #{tpu_custom_call.1} parent=1 // loop_footer
      %s24 = sadd.s32 1, %s20
    $region7: #{tpu_custom_call.1} parent=1 // loop_footer_branch
      %19 = sbr.rel target = $region3
    $region8: #{tpu_custom_call.1} parent=1 // loop_exit
      _
    %1419 = vsyncpa [#allocation5], 1
    %s1420 = scalar_lea.sflag [#allocation5], 1
    %1421 = vsyncpa %s1420, 1
    %1422 = vsyncpa [#allocation8], 1
    %s1423 = scalar_lea.sflag [#allocation8], 1
    %1424 = vsyncpa %s1423, 1
    %1425 = vsyncpa [#allocation6], 1
    %s1426 = scalar_lea.sflag [#allocation6], 1
    %1427 = vsyncpa %s1426, 1

</llo_original>
